<compile_context>
chip_gen: v6e
topology: v6e:2x2x1
jax: 0.10.0
libtpu: 0.0.40
codegen_flags: <defaults>
</compile_context>

<pallas_src>
import functools
import math

import jax
import jax.numpy as jnp
from jax.experimental import pallas as pl
from jax.experimental.pallas import tpu as pltpu


def mha_map_kernel(q_ref, k_ref, wq_ref, bq_ref, wk_ref, bk_ref, o_ref,
                   *, num_heads, head_dim, hw, normalize_fact, compute_dtype):
    """One batch element per grid step.

    q_ref : (1, Q, Dq)        queries
    k_ref : (1, Dq, HW)       NCHW feature map, spatial flattened on lanes
    wq_ref: (Dq, Dh)          q_linear.weight.T
    bq_ref: (1, Dh)           q_linear.bias
    wk_ref: (Dh, Dq)          k_linear.weight (1x1 conv weight)
    bk_ref: (Dh, 1)           k_linear.bias
    o_ref : (1, Q, nh*HW)     softmax(weights.flatten(2)) for this batch
    """
    q = q_ref[0]                                   # (Q, Dq)
    k = k_ref[0]                                   # (Dq, HW)  lane-dense in HW

    # Projections. Linear for q; the 1x1 conv is a per-pixel Linear, computed
    # as wk @ k so HW stays on lanes. f32 accumulation regardless of operand
    # dtype; biases added in f32.
    qp = jnp.dot(q, wq_ref[...], preferred_element_type=jnp.float32) + bq_ref[...]
    qp = (qp * normalize_fact).astype(compute_dtype)          # (Q, Dh)
    kp = (jnp.dot(wk_ref[...], k, preferred_element_type=jnp.float32)
          + bk_ref[...]).astype(compute_dtype)                # (Dh, HW)

    # Pass 1: per-head scores (head-major order == flatten of (Q, nh, H, W)).
    # The contraction is inherently per-head and only head_dim deep, so these
    # stay plain 2-D MXU dots.  The running row-max over the full flattened
    # softmax axis (nh*HW) is folded in while each tile is live in vregs.
    scores = []
    row_max = None
    for n in range(num_heads):
        qs = qp[:, n * head_dim:(n + 1) * head_dim]           # (Q, hd)
        ks = kp[n * head_dim:(n + 1) * head_dim, :]           # (hd, HW)
        s = jnp.dot(qs, ks, preferred_element_type=jnp.float32)   # (Q, HW)
        scores.append(s)
        m_n = jnp.max(s, axis=-1, keepdims=True)
        row_max = m_n if row_max is None else jnp.maximum(row_max, m_n)

    # Pass 2: exponentiate (EUP) and accumulate the softmax denominator.
    exps = []
    denom = None
    for n in range(num_heads):
        e = jnp.exp(scores[n] - row_max)                      # (Q, HW)
        exps.append(e)
        d_n = jnp.sum(e, axis=-1, keepdims=True)              # (Q, 1)
        denom = d_n if denom is None else denom + d_n

    inv = pl.reciprocal(denom, approx=False)                  # (Q, 1)

    # Pass 3: single lane-dense (HW % 128 == 0 -> unmasked vst) store per head
    # at lane offset n*HW.  Each output element is written exactly once and
    # the big (Q, nh*HW) intermediate is never read back from VMEM.
    for n in range(num_heads):
        o_ref[0, :, n * hw:(n + 1) * hw] = exps[n] * inv


def mh_attention_map(q, k_nchw, wq, bq, wk, bk, *, num_heads,
                     compute_dtype=jnp.float32):
    B, Qn, Dq = q.shape
    _, C, H, W = k_nchw.shape
    Dh = wq.shape[0]
    assert C == Dq and Dh % num_heads == 0
    hd = Dh // num_heads
    HW = H * W
    normalize_fact = float(Dh / num_heads) ** (-0.5)

    # NCHW -> (B, C, HW) is a free reshape (no transpose, no extra HBM pass).
    k_flat = k_nchw.reshape(B, C, HW).astype(compute_dtype)
    q_in = q.astype(compute_dtype)
    wq_t = wq.T.astype(compute_dtype)          # (Dq, Dh)
    wk_in = wk.astype(compute_dtype)           # (Dh, Dq)
    bq2 = bq.reshape(1, Dh).astype(jnp.float32)
    bk2 = bk.reshape(Dh, 1).astype(jnp.float32)

    kernel = functools.partial(
        mha_map_kernel, num_heads=num_heads, head_dim=hd, hw=HW,
        normalize_fact=normalize_fact, compute_dtype=compute_dtype)

    out_flat = pl.pallas_call(
        kernel,
        out_shape=jax.ShapeDtypeStruct((B, Qn, num_heads * HW), jnp.float32),
        grid=(B,),
        in_specs=[
            pl.BlockSpec((1, Qn, Dq), lambda b: (b, 0, 0)),
            pl.BlockSpec((1, C, HW), lambda b: (b, 0, 0)),
            pl.BlockSpec((Dq, Dh), lambda b: (0, 0)),
            pl.BlockSpec((1, Dh), lambda b: (0, 0)),
            pl.BlockSpec((Dh, Dq), lambda b: (0, 0)),
            pl.BlockSpec((Dh, 1), lambda b: (0, 0)),
        ],
        out_specs=pl.BlockSpec((1, Qn, num_heads * HW), lambda b: (b, 0, 0)),
        compiler_params=pltpu.CompilerParams(dimension_semantics=("parallel",)),
    )(q_in, k_flat, wq_t, bq2, wk_in, bk2)

    # Free reshape: head-major flat lane layout == flatten of (Q, nh, H, W).
    return out_flat.reshape(B, Qn, num_heads, H, W)


def _reference(q, k_nchw, wq, bq, wk, bk, num_heads):
    """Pure-jnp reproduction of the PyTorch forward (mask=None, dropout=0)."""
    B, Qn, Dq = q.shape
    _, C, H, W = k_nchw.shape
    Dh = wq.shape[0]
    hd = Dh // num_heads
    norm = float(Dh / num_heads) ** (-0.5)
    qp = q @ wq.T + bq                                        # (B, Q, Dh)
    kp = jnp.einsum('bchw,dc->bdhw', k_nchw, wk) + bk[None, :, None, None]
    qh = qp.reshape(B, Qn, num_heads, hd)
    kh = kp.reshape(B, num_heads, hd, H, W)
    weights = jnp.einsum('bqnc,bnchw->bqnhw', qh * norm, kh)
    sm = jax.nn.softmax(weights.reshape(B, Qn, -1), axis=-1)
    return sm.reshape(weights.shape)


if __name__ == "__main__":
    # Small shapes consistent with the module:
    B, Qn = 2, 8                    # batch, number of query slots
    query_dim = 4                   # input channels of k / feature dim of q
    hidden_dim, num_heads = 32, 8   # hidden_dim % num_heads == 0
    H = W = 16

    key = jax.random.PRNGKey(0)
    kq, kk, kwq, kwk = jax.random.split(key, 4)

    q = jax.random.normal(kq, (B, Qn, query_dim), dtype=jnp.float32)
    k = jax.random.normal(kk, (B, query_dim, H, W), dtype=jnp.float32)  # NCHW

    # Deterministic parameter init mirroring __init__:
    # xavier_uniform_ on weights (shape (hidden_dim, query_dim)), zero biases.
    bound = math.sqrt(6.0 / (query_dim + hidden_dim))
    wq = jax.random.uniform(kwq, (hidden_dim, query_dim), jnp.float32, -bound, bound)
    wk = jax.random.uniform(kwk, (hidden_dim, query_dim), jnp.float32, -bound, bound)
    bq = jnp.zeros((hidden_dim,), jnp.float32)
    bk = jnp.zeros((hidden_dim,), jnp.float32)

    out = mh_attention_map(q, k, wq, bq, wk, bk, num_heads=num_heads)
    out = jax.block_until_ready(out)

    ref = _reference(q, k, wq, bq, wk, bk, num_heads)
    assert out.shape == (B, Qn, num_heads, H, W)
    assert jnp.allclose(out, ref, rtol=1e-5, atol=1e-5), "mismatch vs reference"

    print("KERNEL_OK")
</pallas_src>

<mosaic_0001>
module attributes {stable_mosaic.version = 11 : i64} {
  func.func @mha_map_kernel(%arg0: i32, %arg1: memref<1x8x4xf32, #tpu.memory_space<vmem>>, %arg2: memref<1x4x256xf32, #tpu.memory_space<vmem>>, %arg3: memref<4x32xf32, #tpu.memory_space<vmem>>, %arg4: memref<1x32xf32, #tpu.memory_space<vmem>>, %arg5: memref<32x4xf32, #tpu.memory_space<vmem>>, %arg6: memref<32x1xf32, #tpu.memory_space<vmem>>, %arg7: memref<1x8x2048xf32, #tpu.memory_space<vmem>>) attributes {dimension_semantics = [#tpu.dimension_semantics<parallel>], iteration_bounds = array<i64: 2>, scalar_prefetch = 0 : i64, scratch_operands = 0 : i64, tpu.core_type = #tpu.core_type<tc>, window_params = [{transform_indices = @transform_0, window_bounds = array<i64: 1, 8, 4>}, {transform_indices = @transform_1, window_bounds = array<i64: 1, 4, 256>}, {pipeline_mode = #tpu.pipeline_mode<synchronous>, transform_indices = @transform_2, window_bounds = array<i64: 4, 32>}, {pipeline_mode = #tpu.pipeline_mode<synchronous>, transform_indices = @transform_3, window_bounds = array<i64: 1, 32>}, {pipeline_mode = #tpu.pipeline_mode<synchronous>, transform_indices = @transform_4, window_bounds = array<i64: 32, 4>}, {pipeline_mode = #tpu.pipeline_mode<synchronous>, transform_indices = @transform_5, window_bounds = array<i64: 32, 1>}, {transform_indices = @transform_6, window_bounds = array<i64: 1, 8, 2048>}]} {
    %c0 = arith.constant 0 : index
    %c0_0 = arith.constant 0 : index
    %c0_1 = arith.constant 0 : index
    %0 = vector.load %arg1[%c0, %c0_0, %c0_1] : memref<1x8x4xf32, #tpu.memory_space<vmem>>, vector<1x8x4xf32>
    %1 = vector.shape_cast %0 : vector<1x8x4xf32> to vector<8x4xf32>
    %c0_2 = arith.constant 0 : index
    %c0_3 = arith.constant 0 : index
    %c0_4 = arith.constant 0 : index
    %2 = vector.load %arg2[%c0_2, %c0_3, %c0_4] : memref<1x4x256xf32, #tpu.memory_space<vmem>>, vector<1x4x256xf32>
    %3 = vector.shape_cast %2 : vector<1x4x256xf32> to vector<4x256xf32>
    %c0_5 = arith.constant 0 : index
    %c0_6 = arith.constant 0 : index
    %4 = vector.load %arg3[%c0_5, %c0_6] : memref<4x32xf32, #tpu.memory_space<vmem>>, vector<4x32xf32>
    %cst = arith.constant dense<0.000000e+00> : vector<8x32xf32>
    %5 = tpu.matmul %1, %4, %cst {dimension_numbers = #tpu.dot_dimension_numbers<[1], [0], [0], [1], [0, 0, 1, 1], [], []>} : vector<8x4xf32>, vector<4x32xf32>, vector<8x32xf32> -> vector<8x32xf32>
    %c0_7 = arith.constant 0 : index
    %c0_8 = arith.constant 0 : index
    %6 = vector.load %arg4[%c0_7, %c0_8] : memref<1x32xf32, #tpu.memory_space<vmem>>, vector<1x32xf32>
    %7 = vector.broadcast %6 : vector<1x32xf32> to vector<8x32xf32>
    %8 = arith.addf %5, %7 : vector<8x32xf32>
    %cst_9 = arith.constant 5.000000e-01 : f32
    %9 = vector.broadcast %cst_9 : f32 to vector<8x32xf32>
    %10 = arith.mulf %8, %9 : vector<8x32xf32>
    %c0_10 = arith.constant 0 : index
    %c0_11 = arith.constant 0 : index
    %11 = vector.load %arg5[%c0_10, %c0_11] : memref<32x4xf32, #tpu.memory_space<vmem>>, vector<32x4xf32>
    %cst_12 = arith.constant dense<0.000000e+00> : vector<32x256xf32>
    %12 = tpu.matmul %11, %3, %cst_12 {dimension_numbers = #tpu.dot_dimension_numbers<[1], [0], [0], [1], [0, 0, 1, 1], [], []>} : vector<32x4xf32>, vector<4x256xf32>, vector<32x256xf32> -> vector<32x256xf32>
    %c0_13 = arith.constant 0 : index
    %c0_14 = arith.constant 0 : index
    %13 = vector.load %arg6[%c0_13, %c0_14] : memref<32x1xf32, #tpu.memory_space<vmem>>, vector<32x1xf32>
    %14 = vector.broadcast %13 : vector<32x1xf32> to vector<32x256xf32>
    %15 = arith.addf %12, %14 : vector<32x256xf32>
    %16 = vector.extract_strided_slice %10 {offsets = [0, 0], sizes = [8, 4], strides = [1, 1]} : vector<8x32xf32> to vector<8x4xf32>
    %17 = vector.extract_strided_slice %15 {offsets = [0, 0], sizes = [4, 256], strides = [1, 1]} : vector<32x256xf32> to vector<4x256xf32>
    %cst_15 = arith.constant dense<0.000000e+00> : vector<8x256xf32>
    %18 = tpu.matmul %16, %17, %cst_15 {dimension_numbers = #tpu.dot_dimension_numbers<[1], [0], [0], [1], [0, 0, 1, 1], [], []>} : vector<8x4xf32>, vector<4x256xf32>, vector<8x256xf32> -> vector<8x256xf32>
    %cst_16 = arith.constant dense<0xFF800000> : vector<8xf32>
    %19 = vector.multi_reduction <maximumf>, %18, %cst_16 [1] : vector<8x256xf32> to vector<8xf32>
    %20 = vector.shape_cast %19 : vector<8xf32> to vector<8x1xf32>
    %21 = vector.extract_strided_slice %10 {offsets = [0, 4], sizes = [8, 4], strides = [1, 1]} : vector<8x32xf32> to vector<8x4xf32>
    %22 = vector.extract_strided_slice %15 {offsets = [4, 0], sizes = [4, 256], strides = [1, 1]} : vector<32x256xf32> to vector<4x256xf32>
    %cst_17 = arith.constant dense<0.000000e+00> : vector<8x256xf32>
    %23 = tpu.matmul %21, %22, %cst_17 {dimension_numbers = #tpu.dot_dimension_numbers<[1], [0], [0], [1], [0, 0, 1, 1], [], []>} : vector<8x4xf32>, vector<4x256xf32>, vector<8x256xf32> -> vector<8x256xf32>
    %cst_18 = arith.constant dense<0xFF800000> : vector<8xf32>
    %24 = vector.multi_reduction <maximumf>, %23, %cst_18 [1] : vector<8x256xf32> to vector<8xf32>
    %25 = vector.shape_cast %24 : vector<8xf32> to vector<8x1xf32>
    %26 = arith.maximumf %20, %25 : vector<8x1xf32>
    %27 = vector.extract_strided_slice %10 {offsets = [0, 8], sizes = [8, 4], strides = [1, 1]} : vector<8x32xf32> to vector<8x4xf32>
    %28 = vector.extract_strided_slice %15 {offsets = [8, 0], sizes = [4, 256], strides = [1, 1]} : vector<32x256xf32> to vector<4x256xf32>
    %cst_19 = arith.constant dense<0.000000e+00> : vector<8x256xf32>
    %29 = tpu.matmul %27, %28, %cst_19 {dimension_numbers = #tpu.dot_dimension_numbers<[1], [0], [0], [1], [0, 0, 1, 1], [], []>} : vector<8x4xf32>, vector<4x256xf32>, vector<8x256xf32> -> vector<8x256xf32>
    %cst_20 = arith.constant dense<0xFF800000> : vector<8xf32>
    %30 = vector.multi_reduction <maximumf>, %29, %cst_20 [1] : vector<8x256xf32> to vector<8xf32>
    %31 = vector.shape_cast %30 : vector<8xf32> to vector<8x1xf32>
    %32 = arith.maximumf %26, %31 : vector<8x1xf32>
    %33 = vector.extract_strided_slice %10 {offsets = [0, 12], sizes = [8, 4], strides = [1, 1]} : vector<8x32xf32> to vector<8x4xf32>
    %34 = vector.extract_strided_slice %15 {offsets = [12, 0], sizes = [4, 256], strides = [1, 1]} : vector<32x256xf32> to vector<4x256xf32>
    %cst_21 = arith.constant dense<0.000000e+00> : vector<8x256xf32>
    %35 = tpu.matmul %33, %34, %cst_21 {dimension_numbers = #tpu.dot_dimension_numbers<[1], [0], [0], [1], [0, 0, 1, 1], [], []>} : vector<8x4xf32>, vector<4x256xf32>, vector<8x256xf32> -> vector<8x256xf32>
    %cst_22 = arith.constant dense<0xFF800000> : vector<8xf32>
    %36 = vector.multi_reduction <maximumf>, %35, %cst_22 [1] : vector<8x256xf32> to vector<8xf32>
    %37 = vector.shape_cast %36 : vector<8xf32> to vector<8x1xf32>
    %38 = arith.maximumf %32, %37 : vector<8x1xf32>
    %39 = vector.extract_strided_slice %10 {offsets = [0, 16], sizes = [8, 4], strides = [1, 1]} : vector<8x32xf32> to vector<8x4xf32>
    %40 = vector.extract_strided_slice %15 {offsets = [16, 0], sizes = [4, 256], strides = [1, 1]} : vector<32x256xf32> to vector<4x256xf32>
    %cst_23 = arith.constant dense<0.000000e+00> : vector<8x256xf32>
    %41 = tpu.matmul %39, %40, %cst_23 {dimension_numbers = #tpu.dot_dimension_numbers<[1], [0], [0], [1], [0, 0, 1, 1], [], []>} : vector<8x4xf32>, vector<4x256xf32>, vector<8x256xf32> -> vector<8x256xf32>
    %cst_24 = arith.constant dense<0xFF800000> : vector<8xf32>
    %42 = vector.multi_reduction <maximumf>, %41, %cst_24 [1] : vector<8x256xf32> to vector<8xf32>
    %43 = vector.shape_cast %42 : vector<8xf32> to vector<8x1xf32>
    %44 = arith.maximumf %38, %43 : vector<8x1xf32>
    %45 = vector.extract_strided_slice %10 {offsets = [0, 20], sizes = [8, 4], strides = [1, 1]} : vector<8x32xf32> to vector<8x4xf32>
    %46 = vector.extract_strided_slice %15 {offsets = [20, 0], sizes = [4, 256], strides = [1, 1]} : vector<32x256xf32> to vector<4x256xf32>
    %cst_25 = arith.constant dense<0.000000e+00> : vector<8x256xf32>
    %47 = tpu.matmul %45, %46, %cst_25 {dimension_numbers = #tpu.dot_dimension_numbers<[1], [0], [0], [1], [0, 0, 1, 1], [], []>} : vector<8x4xf32>, vector<4x256xf32>, vector<8x256xf32> -> vector<8x256xf32>
    %cst_26 = arith.constant dense<0xFF800000> : vector<8xf32>
    %48 = vector.multi_reduction <maximumf>, %47, %cst_26 [1] : vector<8x256xf32> to vector<8xf32>
    %49 = vector.shape_cast %48 : vector<8xf32> to vector<8x1xf32>
    %50 = arith.maximumf %44, %49 : vector<8x1xf32>
    %51 = vector.extract_strided_slice %10 {offsets = [0, 24], sizes = [8, 4], strides = [1, 1]} : vector<8x32xf32> to vector<8x4xf32>
    %52 = vector.extract_strided_slice %15 {offsets = [24, 0], sizes = [4, 256], strides = [1, 1]} : vector<32x256xf32> to vector<4x256xf32>
    %cst_27 = arith.constant dense<0.000000e+00> : vector<8x256xf32>
    %53 = tpu.matmul %51, %52, %cst_27 {dimension_numbers = #tpu.dot_dimension_numbers<[1], [0], [0], [1], [0, 0, 1, 1], [], []>} : vector<8x4xf32>, vector<4x256xf32>, vector<8x256xf32> -> vector<8x256xf32>
    %cst_28 = arith.constant dense<0xFF800000> : vector<8xf32>
    %54 = vector.multi_reduction <maximumf>, %53, %cst_28 [1] : vector<8x256xf32> to vector<8xf32>
    %55 = vector.shape_cast %54 : vector<8xf32> to vector<8x1xf32>
    %56 = arith.maximumf %50, %55 : vector<8x1xf32>
    %57 = vector.extract_strided_slice %10 {offsets = [0, 28], sizes = [8, 4], strides = [1, 1]} : vector<8x32xf32> to vector<8x4xf32>
    %58 = vector.extract_strided_slice %15 {offsets = [28, 0], sizes = [4, 256], strides = [1, 1]} : vector<32x256xf32> to vector<4x256xf32>
    %cst_29 = arith.constant dense<0.000000e+00> : vector<8x256xf32>
    %59 = tpu.matmul %57, %58, %cst_29 {dimension_numbers = #tpu.dot_dimension_numbers<[1], [0], [0], [1], [0, 0, 1, 1], [], []>} : vector<8x4xf32>, vector<4x256xf32>, vector<8x256xf32> -> vector<8x256xf32>
    %cst_30 = arith.constant dense<0xFF800000> : vector<8xf32>
    %60 = vector.multi_reduction <maximumf>, %59, %cst_30 [1] : vector<8x256xf32> to vector<8xf32>
    %61 = vector.shape_cast %60 : vector<8xf32> to vector<8x1xf32>
    %62 = arith.maximumf %56, %61 : vector<8x1xf32>
    %63 = vector.broadcast %62 : vector<8x1xf32> to vector<8x256xf32>
    %64 = arith.subf %18, %63 : vector<8x256xf32>
    %65 = math.exp %64 : vector<8x256xf32>
    %cst_31 = arith.constant dense<0.000000e+00> : vector<8xf32>
    %66 = vector.multi_reduction <add>, %65, %cst_31 [1] : vector<8x256xf32> to vector<8xf32>
    %67 = vector.shape_cast %66 : vector<8xf32> to vector<8x1xf32>
    %68 = vector.broadcast %62 : vector<8x1xf32> to vector<8x256xf32>
    %69 = arith.subf %23, %68 : vector<8x256xf32>
    %70 = math.exp %69 : vector<8x256xf32>
    %cst_32 = arith.constant dense<0.000000e+00> : vector<8xf32>
    %71 = vector.multi_reduction <add>, %70, %cst_32 [1] : vector<8x256xf32> to vector<8xf32>
    %72 = vector.shape_cast %71 : vector<8xf32> to vector<8x1xf32>
    %73 = arith.addf %67, %72 : vector<8x1xf32>
    %74 = vector.broadcast %62 : vector<8x1xf32> to vector<8x256xf32>
    %75 = arith.subf %29, %74 : vector<8x256xf32>
    %76 = math.exp %75 : vector<8x256xf32>
    %cst_33 = arith.constant dense<0.000000e+00> : vector<8xf32>
    %77 = vector.multi_reduction <add>, %76, %cst_33 [1] : vector<8x256xf32> to vector<8xf32>
    %78 = vector.shape_cast %77 : vector<8xf32> to vector<8x1xf32>
    %79 = arith.addf %73, %78 : vector<8x1xf32>
    %80 = vector.broadcast %62 : vector<8x1xf32> to vector<8x256xf32>
    %81 = arith.subf %35, %80 : vector<8x256xf32>
    %82 = math.exp %81 : vector<8x256xf32>
    %cst_34 = arith.constant dense<0.000000e+00> : vector<8xf32>
    %83 = vector.multi_reduction <add>, %82, %cst_34 [1] : vector<8x256xf32> to vector<8xf32>
    %84 = vector.shape_cast %83 : vector<8xf32> to vector<8x1xf32>
    %85 = arith.addf %79, %84 : vector<8x1xf32>
    %86 = vector.broadcast %62 : vector<8x1xf32> to vector<8x256xf32>
    %87 = arith.subf %41, %86 : vector<8x256xf32>
    %88 = math.exp %87 : vector<8x256xf32>
    %cst_35 = arith.constant dense<0.000000e+00> : vector<8xf32>
    %89 = vector.multi_reduction <add>, %88, %cst_35 [1] : vector<8x256xf32> to vector<8xf32>
    %90 = vector.shape_cast %89 : vector<8xf32> to vector<8x1xf32>
    %91 = arith.addf %85, %90 : vector<8x1xf32>
    %92 = vector.broadcast %62 : vector<8x1xf32> to vector<8x256xf32>
    %93 = arith.subf %47, %92 : vector<8x256xf32>
    %94 = math.exp %93 : vector<8x256xf32>
    %cst_36 = arith.constant dense<0.000000e+00> : vector<8xf32>
    %95 = vector.multi_reduction <add>, %94, %cst_36 [1] : vector<8x256xf32> to vector<8xf32>
    %96 = vector.shape_cast %95 : vector<8xf32> to vector<8x1xf32>
    %97 = arith.addf %91, %96 : vector<8x1xf32>
    %98 = vector.broadcast %62 : vector<8x1xf32> to vector<8x256xf32>
    %99 = arith.subf %53, %98 : vector<8x256xf32>
    %100 = math.exp %99 : vector<8x256xf32>
    %cst_37 = arith.constant dense<0.000000e+00> : vector<8xf32>
    %101 = vector.multi_reduction <add>, %100, %cst_37 [1] : vector<8x256xf32> to vector<8xf32>
    %102 = vector.shape_cast %101 : vector<8xf32> to vector<8x1xf32>
    %103 = arith.addf %97, %102 : vector<8x1xf32>
    %104 = vector.broadcast %62 : vector<8x1xf32> to vector<8x256xf32>
    %105 = arith.subf %59, %104 : vector<8x256xf32>
    %106 = math.exp %105 : vector<8x256xf32>
    %cst_38 = arith.constant dense<0.000000e+00> : vector<8xf32>
    %107 = vector.multi_reduction <add>, %106, %cst_38 [1] : vector<8x256xf32> to vector<8xf32>
    %108 = vector.shape_cast %107 : vector<8xf32> to vector<8x1xf32>
    %109 = arith.addf %103, %108 : vector<8x1xf32>
    %110 = tpu.reciprocal %109 : vector<8x1xf32> -> vector<8x1xf32>
    %111 = vector.broadcast %110 : vector<8x1xf32> to vector<8x256xf32>
    %112 = arith.mulf %65, %111 : vector<8x256xf32>
    %c0_39 = arith.constant 0 : index
    %c0_40 = arith.constant 0 : index
    %c0_41 = arith.constant 0 : index
    %113 = vector.load %arg7[%c0_39, %c0_40, %c0_41] : memref<1x8x2048xf32, #tpu.memory_space<vmem>>, vector<1x8x256xf32>
    %114 = vector.shape_cast %113 : vector<1x8x256xf32> to vector<8x256xf32>
    %115 = vector.shape_cast %112 : vector<8x256xf32> to vector<1x8x256xf32>
    tpu.vector_store %arg7[%c0_39, %c0_40, %c0_41], %115 {strides = array<i32>} : memref<1x8x2048xf32, #tpu.memory_space<vmem>>, vector<1x8x256xf32>,
    %116 = vector.broadcast %110 : vector<8x1xf32> to vector<8x256xf32>
    %117 = arith.mulf %70, %116 : vector<8x256xf32>
    %c0_42 = arith.constant 0 : index
    %c0_43 = arith.constant 0 : index
    %c256 = arith.constant 256 : index
    %118 = vector.load %arg7[%c0_42, %c0_43, %c256] : memref<1x8x2048xf32, #tpu.memory_space<vmem>>, vector<1x8x256xf32>
    %119 = vector.shape_cast %118 : vector<1x8x256xf32> to vector<8x256xf32>
    %120 = vector.shape_cast %117 : vector<8x256xf32> to vector<1x8x256xf32>
    tpu.vector_store %arg7[%c0_42, %c0_43, %c256], %120 {strides = array<i32>} : memref<1x8x2048xf32, #tpu.memory_space<vmem>>, vector<1x8x256xf32>,
    %121 = vector.broadcast %110 : vector<8x1xf32> to vector<8x256xf32>
    %122 = arith.mulf %76, %121 : vector<8x256xf32>
    %c0_44 = arith.constant 0 : index
    %c0_45 = arith.constant 0 : index
    %c512 = arith.constant 512 : index
    %123 = vector.load %arg7[%c0_44, %c0_45, %c512] : memref<1x8x2048xf32, #tpu.memory_space<vmem>>, vector<1x8x256xf32>
    %124 = vector.shape_cast %123 : vector<1x8x256xf32> to vector<8x256xf32>
    %125 = vector.shape_cast %122 : vector<8x256xf32> to vector<1x8x256xf32>
    tpu.vector_store %arg7[%c0_44, %c0_45, %c512], %125 {strides = array<i32>} : memref<1x8x2048xf32, #tpu.memory_space<vmem>>, vector<1x8x256xf32>,
    %126 = vector.broadcast %110 : vector<8x1xf32> to vector<8x256xf32>
    %127 = arith.mulf %82, %126 : vector<8x256xf32>
    %c0_46 = arith.constant 0 : index
    %c0_47 = arith.constant 0 : index
    %c768 = arith.constant 768 : index
    %128 = vector.load %arg7[%c0_46, %c0_47, %c768] : memref<1x8x2048xf32, #tpu.memory_space<vmem>>, vector<1x8x256xf32>
    %129 = vector.shape_cast %128 : vector<1x8x256xf32> to vector<8x256xf32>
    %130 = vector.shape_cast %127 : vector<8x256xf32> to vector<1x8x256xf32>
    tpu.vector_store %arg7[%c0_46, %c0_47, %c768], %130 {strides = array<i32>} : memref<1x8x2048xf32, #tpu.memory_space<vmem>>, vector<1x8x256xf32>,
    %131 = vector.broadcast %110 : vector<8x1xf32> to vector<8x256xf32>
    %132 = arith.mulf %88, %131 : vector<8x256xf32>
    %c0_48 = arith.constant 0 : index
    %c0_49 = arith.constant 0 : index
    %c1024 = arith.constant 1024 : index
    %133 = vector.load %arg7[%c0_48, %c0_49, %c1024] : memref<1x8x2048xf32, #tpu.memory_space<vmem>>, vector<1x8x256xf32>
    %134 = vector.shape_cast %133 : vector<1x8x256xf32> to vector<8x256xf32>
    %135 = vector.shape_cast %132 : vector<8x256xf32> to vector<1x8x256xf32>
    tpu.vector_store %arg7[%c0_48, %c0_49, %c1024], %135 {strides = array<i32>} : memref<1x8x2048xf32, #tpu.memory_space<vmem>>, vector<1x8x256xf32>,
    %136 = vector.broadcast %110 : vector<8x1xf32> to vector<8x256xf32>
    %137 = arith.mulf %94, %136 : vector<8x256xf32>
    %c0_50 = arith.constant 0 : index
    %c0_51 = arith.constant 0 : index
    %c1280 = arith.constant 1280 : index
    %138 = vector.load %arg7[%c0_50, %c0_51, %c1280] : memref<1x8x2048xf32, #tpu.memory_space<vmem>>, vector<1x8x256xf32>
    %139 = vector.shape_cast %138 : vector<1x8x256xf32> to vector<8x256xf32>
    %140 = vector.shape_cast %137 : vector<8x256xf32> to vector<1x8x256xf32>
    tpu.vector_store %arg7[%c0_50, %c0_51, %c1280], %140 {strides = array<i32>} : memref<1x8x2048xf32, #tpu.memory_space<vmem>>, vector<1x8x256xf32>,
    %141 = vector.broadcast %110 : vector<8x1xf32> to vector<8x256xf32>
    %142 = arith.mulf %100, %141 : vector<8x256xf32>
    %c0_52 = arith.constant 0 : index
    %c0_53 = arith.constant 0 : index
    %c1536 = arith.constant 1536 : index
    %143 = vector.load %arg7[%c0_52, %c0_53, %c1536] : memref<1x8x2048xf32, #tpu.memory_space<vmem>>, vector<1x8x256xf32>
    %144 = vector.shape_cast %143 : vector<1x8x256xf32> to vector<8x256xf32>
    %145 = vector.shape_cast %142 : vector<8x256xf32> to vector<1x8x256xf32>
    tpu.vector_store %arg7[%c0_52, %c0_53, %c1536], %145 {strides = array<i32>} : memref<1x8x2048xf32, #tpu.memory_space<vmem>>, vector<1x8x256xf32>,
    %146 = vector.broadcast %110 : vector<8x1xf32> to vector<8x256xf32>
    %147 = arith.mulf %106, %146 : vector<8x256xf32>
    %c0_54 = arith.constant 0 : index
    %c0_55 = arith.constant 0 : index
    %c1792 = arith.constant 1792 : index
    %148 = vector.load %arg7[%c0_54, %c0_55, %c1792] : memref<1x8x2048xf32, #tpu.memory_space<vmem>>, vector<1x8x256xf32>
    %149 = vector.shape_cast %148 : vector<1x8x256xf32> to vector<8x256xf32>
    %150 = vector.shape_cast %147 : vector<8x256xf32> to vector<1x8x256xf32>
    tpu.vector_store %arg7[%c0_54, %c0_55, %c1792], %150 {strides = array<i32>} : memref<1x8x2048xf32, #tpu.memory_space<vmem>>, vector<1x8x256xf32>,
    return
  }
  func.func @transform_0(%arg0: i32) -> (i32, i32, i32) {
    %c0_i32 = arith.constant 0 : i32
    %c0_i32_0 = arith.constant 0 : i32
    %c0_i32_1 = arith.constant 0 : i32
    return %arg0, %c0_i32, %c0_i32_0 : i32, i32, i32
  }
  func.func @transform_1(%arg0: i32) -> (i32, i32, i32) {
    %c0_i32 = arith.constant 0 : i32
    %c0_i32_0 = arith.constant 0 : i32
    %c0_i32_1 = arith.constant 0 : i32
    return %arg0, %c0_i32, %c0_i32_0 : i32, i32, i32
  }
  func.func @transform_2(%arg0: i32) -> (i32, i32) {
    %c0_i32 = arith.constant 0 : i32
    %c0_i32_0 = arith.constant 0 : i32
    %c0_i32_1 = arith.constant 0 : i32
    return %c0_i32, %c0_i32_0 : i32, i32
  }
  func.func @transform_3(%arg0: i32) -> (i32, i32) {
    %c0_i32 = arith.constant 0 : i32
    %c0_i32_0 = arith.constant 0 : i32
    %c0_i32_1 = arith.constant 0 : i32
    return %c0_i32, %c0_i32_0 : i32, i32
  }
  func.func @transform_4(%arg0: i32) -> (i32, i32) {
    %c0_i32 = arith.constant 0 : i32
    %c0_i32_0 = arith.constant 0 : i32
    %c0_i32_1 = arith.constant 0 : i32
    return %c0_i32, %c0_i32_0 : i32, i32
  }
  func.func @transform_5(%arg0: i32) -> (i32, i32) {
    %c0_i32 = arith.constant 0 : i32
    %c0_i32_0 = arith.constant 0 : i32
    %c0_i32_1 = arith.constant 0 : i32
    return %c0_i32, %c0_i32_0 : i32, i32
  }
  func.func @transform_6(%arg0: i32) -> (i32, i32, i32) {
    %c0_i32 = arith.constant 0 : i32
    %c0_i32_0 = arith.constant 0 : i32
    %c0_i32_1 = arith.constant 0 : i32
    return %arg0, %c0_i32, %c0_i32_0 : i32, i32, i32
  }
}

</mosaic_0001>

<llo_original>
// kernel: tpu_custom_call.1
$region0: #{tpu_custom_call.1}
  #allocation0 [shape = 'u32[]', space=smem, size = 0x4, offset = 0x4, fixed_abs, tag = 'smem constant byte address 0x4 - core index']
  #allocation1 [shape = 'u32[144,128]{1,0:T(1,128)}', space=vmem, size = 0x12000, scoped, tag = 'internal scratch']
  %s0 = inlined_call_operand.vmem [shape: f32[2,8,4], index: 0, kind: input, shape index: {}]
  %s1 = inlined_call_operand.vmem [shape: f32[2,4,256], index: 1, kind: input, shape index: {}]
  %s2 = inlined_call_operand.vmem [shape: f32[4,32], index: 2, kind: input, shape index: {}]
  %s3 = inlined_call_operand.vmem [shape: f32[1,32], index: 3, kind: input, shape index: {}]
  %s4 = inlined_call_operand.vmem [shape: f32[32,4], index: 4, kind: input, shape index: {}]
  %s5 = inlined_call_operand.vmem [shape: f32[32,1], index: 5, kind: input, shape index: {}]
  %s6 = inlined_call_operand.hbm [shape: f32[2,8,2048], index: 6, kind: output, shape index: {}]
  %s7 = sld [smem:[#allocation0]]
  $region57: #{tpu_custom_call.1} parent=0
    _
  %s9 = ssub.s32 1, %s7
  %s10 = scalar_select 0, %s9, %s7
  $region1: #{tpu_custom_call.1} parent=0
    #allocation2 [shape = 'u8[131072]{0}', space=vmem, size = 0x20000, scoped, tag = 'output window, operand 0']
    #allocation3 [shape = 's32[2]{0}', space=sflag, size = 0x8, scoped, tag = 'scoped memory for tpu_custom_call.1']
    %11 = vsyncpa [#allocation3], 0
    %s12 = scalar_lea.sflag [#allocation3], 1
    %13 = vsyncpa %s12, 0
    loop: start=0, step=1, limit=4
    $region2: #{tpu_custom_call.1} parent=1 // loop_pre_header
      _
    $region3: #{tpu_custom_call.1} parent=1 // loop_header
      %s15 = sphi 0, %s19
      %p16 = scmp.ge.s32.totalorder %s15, 4
      %s25 = sphi 0, %s27
      %s28 = sphi 0, %s25
      %s29 = sphi 0, %s28
      %s45 = sphi 0, %s29
      %s51 = sphi 0, %s53
      %s54 = sphi 0, %s51
      %s55 = sphi 0, %s54
      %s71 = sphi 0, %s55
      %s75 = sphi 0, %s75
      %s77 = sphi 0, %s75
      %s78 = sphi 0, %s77
      %s92 = sphi 0, %s78
      %s96 = sphi 0, %s96
      %s98 = sphi 0, %s96
      %s99 = sphi 0, %s98
      %s113 = sphi 0, %s99
      %s117 = sphi 0, %s117
      %s119 = sphi 0, %s117
      %s120 = sphi 0, %s119
      %s134 = sphi 0, %s120
      %s138 = sphi 0, %s138
      %s140 = sphi 0, %s138
      %s141 = sphi 0, %s140
      %s155 = sphi 0, %s141
      %s161 = sphi 0, %s163
      %s164 = sphi 0, %s161
      %s165 = sphi 0, %s164
      %s181 = sphi 0, %s165
    $region4: #{tpu_custom_call.1} parent=1 // loop_header_branch
      %18 = sbr.rel (%p16) target = $region8
    $region5: #{tpu_custom_call.1} parent=1 // loop_body
      %s20 = ssub.s32 %s15, 1
      %s21 = ssub.s32 %s15, 2
      %s22 = sadd.s32 %s15, 1
      %s23 = ssub.s32 %s15, %s22
      %p24 = scmp.eq.s32.totalorder %s23, 0
      %s26 = sadd.s32 %s25, 1
      %s27 = scalar_select %p24, %s25, %s26
      %p30 = pneg %p24
      %p31 = scmp.eq.s32.totalorder %s15, 1
      %p32 = por %p30, %p31
      %p33 = scmp.ne.s32.totalorder %s25, %s28
      %p34 = scmp.eq.s32.totalorder %s15, 0
      %p35 = por %p33, %p34
      %p36 = scmp.ne.s32.totalorder %s25, %s28
      %p37 = scmp.eq.s32.totalorder %s20, 1
      %p38 = por %p36, %p37
      %p39 = scmp.ne.s32.totalorder %s28, %s29
      %p40 = scmp.eq.s32.totalorder %s20, 0
      %p41 = por %p39, %p40
      %p42 = scmp.ne.s32.totalorder %s28, %s29
      %p43 = scmp.eq.s32.totalorder %s21, 1
      %p44 = por %p42, %p43
      %p46 = scmp.ne.s32.totalorder %s29, %s45
      %p47 = scmp.eq.s32.totalorder %s21, 0
      %p48 = por %p46, %p47
      %s49 = ssub.s32 %s15, %s22
      %p50 = scmp.eq.s32.totalorder %s49, 0
      %s52 = sadd.s32 %s51, 1
      %s53 = scalar_select %p50, %s51, %s52
      %p56 = pneg %p50
      %p57 = scmp.eq.s32.totalorder %s15, 1
      %p58 = por %p56, %p57
      %p59 = scmp.ne.s32.totalorder %s51, %s54
      %p60 = scmp.eq.s32.totalorder %s15, 0
      %p61 = por %p59, %p60
      %p62 = scmp.ne.s32.totalorder %s51, %s54
      %p63 = scmp.eq.s32.totalorder %s20, 1
      %p64 = por %p62, %p63
      %p65 = scmp.ne.s32.totalorder %s54, %s55
      %p66 = scmp.eq.s32.totalorder %s20, 0
      %p67 = por %p65, %p66
      %p68 = scmp.ne.s32.totalorder %s54, %s55
      %p69 = scmp.eq.s32.totalorder %s21, 1
      %p70 = por %p68, %p69
      %p72 = scmp.ne.s32.totalorder %s55, %s71
      %p73 = scmp.eq.s32.totalorder %s21, 0
      %p74 = por %p72, %p73
      %s76 = sadd.s32 %s75, 1
      %p79 = scmp.eq.s32.totalorder %s15, 1
      %p80 = scmp.ne.s32.totalorder %s75, %s77
      %p81 = scmp.eq.s32.totalorder %s15, 0
      %p82 = por %p80, %p81
      %p83 = scmp.ne.s32.totalorder %s75, %s77
      %p84 = scmp.eq.s32.totalorder %s20, 1
      %p85 = por %p83, %p84
      %p86 = scmp.ne.s32.totalorder %s77, %s78
      %p87 = scmp.eq.s32.totalorder %s20, 0
      %p88 = por %p86, %p87
      %p89 = scmp.ne.s32.totalorder %s77, %s78
      %p90 = scmp.eq.s32.totalorder %s21, 1
      %p91 = por %p89, %p90
      %p93 = scmp.ne.s32.totalorder %s78, %s92
      %p94 = scmp.eq.s32.totalorder %s21, 0
      %p95 = por %p93, %p94
      %s97 = sadd.s32 %s96, 1
      %p100 = scmp.eq.s32.totalorder %s15, 1
      %p101 = scmp.ne.s32.totalorder %s96, %s98
      %p102 = scmp.eq.s32.totalorder %s15, 0
      %p103 = por %p101, %p102
      %p104 = scmp.ne.s32.totalorder %s96, %s98
      %p105 = scmp.eq.s32.totalorder %s20, 1
      %p106 = por %p104, %p105
      %p107 = scmp.ne.s32.totalorder %s98, %s99
      %p108 = scmp.eq.s32.totalorder %s20, 0
      %p109 = por %p107, %p108
      %p110 = scmp.ne.s32.totalorder %s98, %s99
      %p111 = scmp.eq.s32.totalorder %s21, 1
      %p112 = por %p110, %p111
      %p114 = scmp.ne.s32.totalorder %s99, %s113
      %p115 = scmp.eq.s32.totalorder %s21, 0
      %p116 = por %p114, %p115
      %s118 = sadd.s32 %s117, 1
      %p121 = scmp.eq.s32.totalorder %s15, 1
      %p122 = scmp.ne.s32.totalorder %s117, %s119
      %p123 = scmp.eq.s32.totalorder %s15, 0
      %p124 = por %p122, %p123
      %p125 = scmp.ne.s32.totalorder %s117, %s119
      %p126 = scmp.eq.s32.totalorder %s20, 1
      %p127 = por %p125, %p126
      %p128 = scmp.ne.s32.totalorder %s119, %s120
      %p129 = scmp.eq.s32.totalorder %s20, 0
      %p130 = por %p128, %p129
      %p131 = scmp.ne.s32.totalorder %s119, %s120
      %p132 = scmp.eq.s32.totalorder %s21, 1
      %p133 = por %p131, %p132
      %p135 = scmp.ne.s32.totalorder %s120, %s134
      %p136 = scmp.eq.s32.totalorder %s21, 0
      %p137 = por %p135, %p136
      %s139 = sadd.s32 %s138, 1
      %p142 = scmp.eq.s32.totalorder %s15, 1
      %p143 = scmp.ne.s32.totalorder %s138, %s140
      %p144 = scmp.eq.s32.totalorder %s15, 0
      %p145 = por %p143, %p144
      %p146 = scmp.ne.s32.totalorder %s138, %s140
      %p147 = scmp.eq.s32.totalorder %s20, 1
      %p148 = por %p146, %p147
      %p149 = scmp.ne.s32.totalorder %s140, %s141
      %p150 = scmp.eq.s32.totalorder %s20, 0
      %p151 = por %p149, %p150
      %p152 = scmp.ne.s32.totalorder %s140, %s141
      %p153 = scmp.eq.s32.totalorder %s21, 1
      %p154 = por %p152, %p153
      %p156 = scmp.ne.s32.totalorder %s141, %s155
      %p157 = scmp.eq.s32.totalorder %s21, 0
      %p158 = por %p156, %p157
      %s159 = ssub.s32 %s15, %s22
      %p160 = scmp.eq.s32.totalorder %s159, 0
      %s162 = sadd.s32 %s161, 1
      %s163 = scalar_select %p160, %s161, %s162
      %p166 = pneg %p160
      %p167 = scmp.eq.s32.totalorder %s15, 1
      %p168 = por %p166, %p167
      %p169 = scmp.ne.s32.totalorder %s161, %s164
      %p170 = scmp.eq.s32.totalorder %s15, 0
      %p171 = por %p169, %p170
      %p172 = scmp.ne.s32.totalorder %s161, %s164
      %p173 = scmp.eq.s32.totalorder %s20, 1
      %p174 = por %p172, %p173
      %p175 = scmp.ne.s32.totalorder %s164, %s165
      %p176 = scmp.eq.s32.totalorder %s20, 0
      %p177 = por %p175, %p176
      %p178 = scmp.ne.s32.totalorder %s164, %s165
      %p179 = scmp.eq.s32.totalorder %s21, 1
      %p180 = por %p178, %p179
      %p182 = scmp.ne.s32.totalorder %s165, %s181
      %p183 = scmp.eq.s32.totalorder %s21, 0
      %p184 = por %p182, %p183
      %p185 = scmp.le.s32.totalorder 1, %s15
      %p186 = scmp.lt.s32.totalorder %s15, 3
      %p187 = pnand %p185, %p186
      %p188 = pneg %p187
      // Predicated region
      $region9: #{tpu_custom_call.1} parent=5 // pred_check
        _
      $region10: #{tpu_custom_call.1} parent=5 // pred_check_branch
        %190 = sbr.rel (%p187) target = $region12
      $region11: #{tpu_custom_call.1} parent=5 // pred_region
        %s191 = ssub.s32 %s15, 1
        // Predicated region
        $region13: #{tpu_custom_call.1} parent=11 // pred_check
          %p192 = pneg %p88
        $region14: #{tpu_custom_call.1} parent=11 // pred_check_branch
          %194 = sbr.rel (%p192) target = $region16
        $region15: #{tpu_custom_call.1} parent=11 // pred_region
          _
        $region16: #{tpu_custom_call.1} parent=11 // pred_fallthru
          _
        // Predicated region
        $region17: #{tpu_custom_call.1} parent=11 // pred_check
          %p195 = pneg %p109
        $region18: #{tpu_custom_call.1} parent=11 // pred_check_branch
          %197 = sbr.rel (%p195) target = $region20
        $region19: #{tpu_custom_call.1} parent=11 // pred_region
          _
        $region20: #{tpu_custom_call.1} parent=11 // pred_fallthru
          _
        // Predicated region
        $region21: #{tpu_custom_call.1} parent=11 // pred_check
          %p198 = pneg %p130
        $region22: #{tpu_custom_call.1} parent=11 // pred_check_branch
          %200 = sbr.rel (%p198) target = $region24
        $region23: #{tpu_custom_call.1} parent=11 // pred_region
          _
        $region24: #{tpu_custom_call.1} parent=11 // pred_fallthru
          _
        // Predicated region
        $region25: #{tpu_custom_call.1} parent=11 // pred_check
          %p201 = pneg %p151
        $region26: #{tpu_custom_call.1} parent=11 // pred_check_branch
          %203 = sbr.rel (%p201) target = $region28
        $region27: #{tpu_custom_call.1} parent=11 // pred_region
          _
        $region28: #{tpu_custom_call.1} parent=11 // pred_fallthru
          _
      $region12: #{tpu_custom_call.1} parent=5 // pred_fallthru
        _
      %p204 = scmp.lt.s32.totalorder %s15, 2
      // Predicated region
      $region29: #{tpu_custom_call.1} parent=5 // pred_check
        %p205 = pneg %p204
      $region30: #{tpu_custom_call.1} parent=5 // pred_check_branch
        %207 = sbr.rel (%p205) target = $region32
      $region31: #{tpu_custom_call.1} parent=5 // pred_region
        // Predicated region
        $region33: #{tpu_custom_call.1} parent=31 // pred_check
          %p208 = pneg %p35
        $region34: #{tpu_custom_call.1} parent=31 // pred_check_branch
          %210 = sbr.rel (%p208) target = $region36
        $region35: #{tpu_custom_call.1} parent=31 // pred_region
          %p211 = scmp.lt.s32.totalorder %s15, 1
          %s212 = scalar_select %p211, %s15, 1
          %s213 = smul.addr %s212, 8
          %s214 = scalar_lea.vmem %s0, %s213
        $region36: #{tpu_custom_call.1} parent=31 // pred_fallthru
          _
        // Predicated region
        $region37: #{tpu_custom_call.1} parent=31 // pred_check
          %p215 = pneg %p61
        $region38: #{tpu_custom_call.1} parent=31 // pred_check_branch
          %217 = sbr.rel (%p215) target = $region40
        $region39: #{tpu_custom_call.1} parent=31 // pred_region
          %p218 = scmp.lt.s32.totalorder %s15, 1
          %s219 = scalar_select %p218, %s15, 1
          %s220 = smul.addr %s219, 2
          %s221 = smul.addr %s220, 4
          %s222 = scalar_lea.vmem %s1, %s221
        $region40: #{tpu_custom_call.1} parent=31 // pred_fallthru
          _
      $region32: #{tpu_custom_call.1} parent=5 // pred_fallthru
        _
      %p223 = scmp.le.s32.totalorder 1, %s15
      %p224 = scmp.lt.s32.totalorder %s15, 3
      %p225 = pnand %p223, %p224
      %p226 = pneg %p225
      // Predicated region
      $region41: #{tpu_custom_call.1} parent=5 // pred_check
        _
      $region42: #{tpu_custom_call.1} parent=5 // pred_check_branch
        %228 = sbr.rel (%p225) target = $region44
      $region43: #{tpu_custom_call.1} parent=5 // pred_region
        %s229 = ssub.s32 %s15, 1
        %p230 = scmp.lt.s32.totalorder %s20, 1
        %s231 = scalar_select %p230, %s20, 1
        %s232 = smul.addr %s231, 8
        %s233 = scalar_lea.vmem %s0, %s232
        %p234 = pneg %p41
        %p235 = pneg %p38
        %p236 = scmp.lt.s32.totalorder %s20, 1
        %s237 = scalar_select %p236, %s20, 1
        %s238 = smul.addr %s237, 2
        %s239 = smul.addr %s238, 4
        %s240 = scalar_lea.vmem %s1, %s239
        %p241 = pneg %p67
        %p242 = pneg %p64
        %p243 = pneg %p88
        %p244 = pneg %p85
        %p245 = pneg %p109
        %p246 = pneg %p106
        %p247 = pneg %p130
        %p248 = pneg %p127
        %p249 = pneg %p151
        %p250 = pneg %p148
        %p251 = pneg %p177
        %p252 = pneg %p174
        %s253 = sand.u32 %s164, 1
        %s254 = scalar_lea.sflag [#allocation3], %s253
        %s255 = sand.u32 %s164, 1
        %s256 = smul.addr %s255, 128
        %s257 = scalar_lea.vmem [#allocation2], %s256
        %p258 = scmp.lt.s32.totalorder %s20, 1
        %s259 = scalar_select %p258, %s20, 1
        %s260 = smul.addr %s259, 8
        %s261 = scalar_lea.vmem %s0, %s260
        %p262 = scmp.lt.s32.totalorder %s20, 1
        %s263 = scalar_select %p262, %s20, 1
        %s264 = smul.addr %s263, 2
        %s265 = smul.addr %s264, 4
        %s266 = scalar_lea.vmem %s1, %s265
        %v267 = vld [vmem:[%s261] sm:$0xff]
        %v268 = vld [vmem:[%s266] sm:$0xff]
        %v269 = vld [vmem:[%s2] sm:$0xf]
        %v270 = vld [vmem:[%s3] sm:$0x1]
        %v272 = vlaneseq
        %v273 = vshrl.u32 %v272, 7
        %v274 = vsub.s32 0, %v273
        %v275 = vrot.slane %v270, %v274
        %vm277 = vcmask 31744
        %v279 = vsel %vm277, %v267, 0
        %vm281 = vcmask 1043456
        %v283 = vsel %vm281, %v269, 0
        %285 = vmatprep.subr.mxu0 0.0
        %286 = vmatpush1.msra.mxu0 0.0
        %287 = vmatprep.subr.mxu0 0.0
        %288 = vmatpush1.msra.mxu0 0.0
        %289 = vmatprep.subr.mxu0 0.0
        %290 = vmatpush1.msra.mxu0 0.0
        %291 = vmatprep.subr.mxu0 0.0
        %292 = vmatpush1.msra.mxu0 0.0
        %293 = vmatprep.subr.mxu0 0.0
        %294 = vmatpush1.msra.mxu0 0.0
        %295 = vmatprep.subr.mxu0 0.0
        %296 = vmatpush1.msra.mxu0 0.0
        %297 = vmatprep.subr.mxu0 0.0
        %298 = vmatpush1.msra.mxu0 0.0
        %299 = vmatprep.subr.mxu0 0.0
        %300 = vmatpush1.msra.mxu0 0.0
        %301 = vmatprep.subr.mxu0 0.0
        %302 = vmatpush1.msra.mxu0 0.0
        %303 = vmatprep.subr.mxu0 0.0
        %304 = vmatpush1.msra.mxu0 0.0
        %305 = vmatprep.subr.mxu0 0.0
        %306 = vmatpush1.msra.mxu0 0.0
        %307 = vmatprep.subr.mxu0 0.0
        %308 = vmatpush1.msra.mxu0 0.0
        %309 = vmatprep.subr.mxu0 0.0
        %310 = vmatpush1.msra.mxu0 0.0
        %311 = vmatprep.subr.mxu0 0.0
        %312 = vmatpush1.msra.mxu0 0.0
        %313 = vmatprep.subr.mxu0 0.0
        %314 = vmatpush1.msra.mxu0 0.0
        %315 = vmatprep.subr.mxu0 0.0
        %316 = vmatpush1.msra.mxu0 %v283
        %317 = vmatprep.subr.mxu0 0.0
        %318 = vmatpush2.msra.mxu0 0.0
        %319 = vmatprep.subr.mxu0 0.0
        %320 = vmatpush2.msra.mxu0 0.0
        %321 = vmatprep.subr.mxu0 0.0
        %322 = vmatpush2.msra.mxu0 0.0
        %323 = vmatprep.subr.mxu0 0.0
        %324 = vmatpush2.msra.mxu0 0.0
        %325 = vmatprep.subr.mxu0 0.0
        %326 = vmatpush2.msra.mxu0 0.0
        %327 = vmatprep.subr.mxu0 0.0
        %328 = vmatpush2.msra.mxu0 0.0
        %329 = vmatprep.subr.mxu0 0.0
        %330 = vmatpush2.msra.mxu0 0.0
        %331 = vmatprep.subr.mxu0 0.0
        %332 = vmatpush2.msra.mxu0 0.0
        %333 = vmatprep.subr.mxu0 0.0
        %334 = vmatpush2.msra.mxu0 0.0
        %335 = vmatprep.subr.mxu0 0.0
        %336 = vmatpush2.msra.mxu0 0.0
        %337 = vmatprep.subr.mxu0 0.0
        %338 = vmatpush2.msra.mxu0 0.0
        %339 = vmatprep.subr.mxu0 0.0
        %340 = vmatpush2.msra.mxu0 0.0
        %341 = vmatprep.subr.mxu0 0.0
        %342 = vmatpush2.msra.mxu0 0.0
        %343 = vmatprep.subr.mxu0 0.0
        %344 = vmatpush2.msra.mxu0 0.0
        %345 = vmatprep.subr.mxu0 0.0
        %346 = vmatpush2.msra.mxu0 0.0
        %347 = vmatprep.subr.mxu0 0.0
        %348 = vmatpush2.msra.mxu0 0.0
        %349 = vmatprep.mubr.f32.mxu0 0.0
        %350 = vmatmul.mubr.f32.gmra.mxu0 %v279
        %v351 = vpop.f32.mrf.mxu0
        %v352 = vadd.f32 %v275, %v351
        %v353 = vpop.f32.mrf.mxu0
        %354 = vdwg.mxu0
        %v355 = vmul.f32 %v352, 0.5
        %v356 = vld [vmem:[%s4] sm:$0xff]
        %v357 = vld [vmem:[%s4 + $0x8] sm:$0xff]
        %v358 = vld [vmem:[%s4 + $0x10] sm:$0xff]
        %v359 = vld [vmem:[%s4 + $0x18] sm:$0xff]
        %v360 = vld [vmem:[%s5] sm:$0xff]
        %v361 = vld [vmem:[%s5 + $0x8] sm:$0xff]
        %v362 = vld [vmem:[%s5 + $0x10] sm:$0xff]
        %v363 = vld [vmem:[%s5 + $0x18] sm:$0xff]
        %365 = vset.pattern.permute.xlu0 0
        %366 = vperm.xlu0 %365, %v360
        %v367 = vpop.permute.xlu0 %366
        %370 = vset.pattern.permute.xlu0 0
        %371 = vperm.xlu0 %370, %v361
        %v372 = vpop.permute.xlu0 %371
        %375 = vset.pattern.permute.xlu0 0
        %376 = vperm.xlu0 %375, %v362
        %v377 = vpop.permute.xlu0 %376
        %380 = vset.pattern.permute.xlu0 0
        %381 = vperm.xlu0 %380, %v363
        %v382 = vpop.permute.xlu0 %381
        %v385 = vcombine.high %v268, %v268
        %v387 = vsel %vm277, %v356, 0
        %v390 = vsel %vm277, %v357, 0
        %v393 = vsel %vm277, %v358, 0
        %v396 = vsel %vm277, %v359, 0
        %v398 = vsel %vm281, %v268, 0
        %v400 = vsel %vm281, %v385, 0
        %402 = vmatprep.subr.mxu0 0.0
        %403 = vmatpush1.msra.mxu0 0.0
        %404 = vmatprep.subr.mxu0 0.0
        %405 = vmatpush1.msra.mxu0 0.0
        %406 = vmatprep.subr.mxu0 0.0
        %407 = vmatpush1.msra.mxu0 0.0
        %408 = vmatprep.subr.mxu0 0.0
        %409 = vmatpush1.msra.mxu0 0.0
        %410 = vmatprep.subr.mxu0 0.0
        %411 = vmatpush1.msra.mxu0 0.0
        %412 = vmatprep.subr.mxu0 0.0
        %413 = vmatpush1.msra.mxu0 0.0
        %414 = vmatprep.subr.mxu0 0.0
        %415 = vmatpush1.msra.mxu0 0.0
        %416 = vmatprep.subr.mxu0 0.0
        %417 = vmatpush1.msra.mxu0 0.0
        %418 = vmatprep.subr.mxu0 0.0
        %419 = vmatpush1.msra.mxu0 0.0
        %420 = vmatprep.subr.mxu0 0.0
        %421 = vmatpush1.msra.mxu0 0.0
        %422 = vmatprep.subr.mxu0 0.0
        %423 = vmatpush1.msra.mxu0 0.0
        %424 = vmatprep.subr.mxu0 0.0
        %425 = vmatpush1.msra.mxu0 0.0
        %426 = vmatprep.subr.mxu0 0.0
        %427 = vmatpush1.msra.mxu0 0.0
        %428 = vmatprep.subr.mxu0 0.0
        %429 = vmatpush1.msra.mxu0 0.0
        %430 = vmatprep.subr.mxu0 0.0
        %431 = vmatpush1.msra.mxu0 0.0
        %432 = vmatprep.subr.mxu0 %v400
        %433 = vmatpush1.msra.mxu0 %v398
        %434 = vmatprep.subr.mxu0 0.0
        %435 = vmatpush2.msra.mxu0 0.0
        %436 = vmatprep.subr.mxu0 0.0
        %437 = vmatpush2.msra.mxu0 0.0
        %438 = vmatprep.subr.mxu0 0.0
        %439 = vmatpush2.msra.mxu0 0.0
        %440 = vmatprep.subr.mxu0 0.0
        %441 = vmatpush2.msra.mxu0 0.0
        %442 = vmatprep.subr.mxu0 0.0
        %443 = vmatpush2.msra.mxu0 0.0
        %444 = vmatprep.subr.mxu0 0.0
        %445 = vmatpush2.msra.mxu0 0.0
        %446 = vmatprep.subr.mxu0 0.0
        %447 = vmatpush2.msra.mxu0 0.0
        %448 = vmatprep.subr.mxu0 0.0
        %449 = vmatpush2.msra.mxu0 0.0
        %450 = vmatprep.subr.mxu0 0.0
        %451 = vmatpush2.msra.mxu0 0.0
        %452 = vmatprep.subr.mxu0 0.0
        %453 = vmatpush2.msra.mxu0 0.0
        %454 = vmatprep.subr.mxu0 0.0
        %455 = vmatpush2.msra.mxu0 0.0
        %456 = vmatprep.subr.mxu0 0.0
        %457 = vmatpush2.msra.mxu0 0.0
        %458 = vmatprep.subr.mxu0 0.0
        %459 = vmatpush2.msra.mxu0 0.0
        %460 = vmatprep.subr.mxu0 0.0
        %461 = vmatpush2.msra.mxu0 0.0
        %462 = vmatprep.subr.mxu0 0.0
        %463 = vmatpush2.msra.mxu0 0.0
        %464 = vmatprep.subr.mxu0 0.0
        %465 = vmatpush2.msra.mxu0 0.0
        %466 = vmatprep.mubr.f32.mxu0 0.0
        %467 = vmatmul.mubr.f32.gmra.mxu0 %v387
        %v468 = vpop.f32.mrf.mxu0
        %v469 = vadd.f32 %v367, %v468
        %v470 = vpop.f32.mrf.mxu0
        %v471 = vadd.f32 %v367, %v470
        %472 = vmatprep.mubr.f32.mxu0 0.0
        %473 = vmatmul.mubr.f32.gmra.mxu0 %v390
        %v474 = vpop.f32.mrf.mxu0
        %v475 = vadd.f32 %v372, %v474
        %v476 = vpop.f32.mrf.mxu0
        %v477 = vadd.f32 %v372, %v476
        %478 = vmatprep.mubr.f32.mxu0 0.0
        %479 = vmatmul.mubr.f32.gmra.mxu0 %v393
        %v480 = vpop.f32.mrf.mxu0
        %v481 = vadd.f32 %v377, %v480
        %v482 = vpop.f32.mrf.mxu0
        %v483 = vadd.f32 %v377, %v482
        %484 = vmatprep.mubr.f32.mxu0 0.0
        %485 = vmatmul.mubr.f32.gmra.mxu0 %v396
        %v486 = vpop.f32.mrf.mxu0
        %v487 = vadd.f32 %v382, %v486
        %v488 = vpop.f32.mrf.mxu0
        %v489 = vadd.f32 %v382, %v488
        %490 = vdwg.mxu0
        %v492 = vsel %vm277, %v355, 0
        %v495 = vsel %vm281, %v469, 0
        %v498 = vsel %vm281, %v471, 0
        %500 = vmatprep.subr.mxu0 0.0
        %501 = vmatpush1.msra.mxu0 0.0
        %502 = vmatprep.subr.mxu0 0.0
        %503 = vmatpush1.msra.mxu0 0.0
        %504 = vmatprep.subr.mxu0 0.0
        %505 = vmatpush1.msra.mxu0 0.0
        %506 = vmatprep.subr.mxu0 0.0
        %507 = vmatpush1.msra.mxu0 0.0
        %508 = vmatprep.subr.mxu0 0.0
        %509 = vmatpush1.msra.mxu0 0.0
        %510 = vmatprep.subr.mxu0 0.0
        %511 = vmatpush1.msra.mxu0 0.0
        %512 = vmatprep.subr.mxu0 0.0
        %513 = vmatpush1.msra.mxu0 0.0
        %514 = vmatprep.subr.mxu0 0.0
        %515 = vmatpush1.msra.mxu0 0.0
        %516 = vmatprep.subr.mxu0 0.0
        %517 = vmatpush1.msra.mxu0 0.0
        %518 = vmatprep.subr.mxu0 0.0
        %519 = vmatpush1.msra.mxu0 0.0
        %520 = vmatprep.subr.mxu0 0.0
        %521 = vmatpush1.msra.mxu0 0.0
        %522 = vmatprep.subr.mxu0 0.0
        %523 = vmatpush1.msra.mxu0 0.0
        %524 = vmatprep.subr.mxu0 0.0
        %525 = vmatpush1.msra.mxu0 0.0
        %526 = vmatprep.subr.mxu0 0.0
        %527 = vmatpush1.msra.mxu0 0.0
        %528 = vmatprep.subr.mxu0 0.0
        %529 = vmatpush1.msra.mxu0 0.0
        %530 = vmatprep.subr.mxu0 %v498
        %531 = vmatpush1.msra.mxu0 %v495
        %532 = vmatprep.subr.mxu0 0.0
        %533 = vmatpush2.msra.mxu0 0.0
        %534 = vmatprep.subr.mxu0 0.0
        %535 = vmatpush2.msra.mxu0 0.0
        %536 = vmatprep.subr.mxu0 0.0
        %537 = vmatpush2.msra.mxu0 0.0
        %538 = vmatprep.subr.mxu0 0.0
        %539 = vmatpush2.msra.mxu0 0.0
        %540 = vmatprep.subr.mxu0 0.0
        %541 = vmatpush2.msra.mxu0 0.0
        %542 = vmatprep.subr.mxu0 0.0
        %543 = vmatpush2.msra.mxu0 0.0
        %544 = vmatprep.subr.mxu0 0.0
        %545 = vmatpush2.msra.mxu0 0.0
        %546 = vmatprep.subr.mxu0 0.0
        %547 = vmatpush2.msra.mxu0 0.0
        %548 = vmatprep.subr.mxu0 0.0
        %549 = vmatpush2.msra.mxu0 0.0
        %550 = vmatprep.subr.mxu0 0.0
        %551 = vmatpush2.msra.mxu0 0.0
        %552 = vmatprep.subr.mxu0 0.0
        %553 = vmatpush2.msra.mxu0 0.0
        %554 = vmatprep.subr.mxu0 0.0
        %555 = vmatpush2.msra.mxu0 0.0
        %556 = vmatprep.subr.mxu0 0.0
        %557 = vmatpush2.msra.mxu0 0.0
        %558 = vmatprep.subr.mxu0 0.0
        %559 = vmatpush2.msra.mxu0 0.0
        %560 = vmatprep.subr.mxu0 0.0
        %561 = vmatpush2.msra.mxu0 0.0
        %562 = vmatprep.subr.mxu0 0.0
        %563 = vmatpush2.msra.mxu0 0.0
        %564 = vmatprep.mubr.f32.mxu0 0.0
        %565 = vmatmul.mubr.f32.gmra.mxu0 %v492
        %v566 = vpop.f32.mrf.mxu0
        %v567 = vadd.f32 0.0, %v566
        %v568 = vpop.f32.mrf.mxu0
        %v569 = vadd.f32 0.0, %v568
        %570 = vdwg.mxu0
        %v571 = vmax.f32 %v567, %v569
        %572 = vmax.xlane.f32.xlu0 %v571
        %v573 = vpop.xlane.xlu0 %572
        %574 = vrot.lane.b32.xlu0 %v355, 124
        %v575 = vpop.permute.xlu0 %574
        %v576 = vrot.slane %v469, 4
        %v577 = vrot.slane %v471, 4
        %v578 = vsel %vm277, %v575, 0
        %v580 = vsel %vm281, %v576, 0
        %v582 = vsel %vm281, %v577, 0
        %584 = vmatprep.subr.mxu0 0.0
        %585 = vmatpush1.msra.mxu0 0.0
        %586 = vmatprep.subr.mxu0 0.0
        %587 = vmatpush1.msra.mxu0 0.0
        %588 = vmatprep.subr.mxu0 0.0
        %589 = vmatpush1.msra.mxu0 0.0
        %590 = vmatprep.subr.mxu0 0.0
        %591 = vmatpush1.msra.mxu0 0.0
        %592 = vmatprep.subr.mxu0 0.0
        %593 = vmatpush1.msra.mxu0 0.0
        %594 = vmatprep.subr.mxu0 0.0
        %595 = vmatpush1.msra.mxu0 0.0
        %596 = vmatprep.subr.mxu0 0.0
        %597 = vmatpush1.msra.mxu0 0.0
        %598 = vmatprep.subr.mxu0 0.0
        %599 = vmatpush1.msra.mxu0 0.0
        %600 = vmatprep.subr.mxu0 0.0
        %601 = vmatpush1.msra.mxu0 0.0
        %602 = vmatprep.subr.mxu0 0.0
        %603 = vmatpush1.msra.mxu0 0.0
        %604 = vmatprep.subr.mxu0 0.0
        %605 = vmatpush1.msra.mxu0 0.0
        %606 = vmatprep.subr.mxu0 0.0
        %607 = vmatpush1.msra.mxu0 0.0
        %608 = vmatprep.subr.mxu0 0.0
        %609 = vmatpush1.msra.mxu0 0.0
        %610 = vmatprep.subr.mxu0 0.0
        %611 = vmatpush1.msra.mxu0 0.0
        %612 = vmatprep.subr.mxu0 0.0
        %613 = vmatpush1.msra.mxu0 0.0
        %614 = vmatprep.subr.mxu0 %v582
        %615 = vmatpush1.msra.mxu0 %v580
        %616 = vmatprep.subr.mxu0 0.0
        %617 = vmatpush2.msra.mxu0 0.0
        %618 = vmatprep.subr.mxu0 0.0
        %619 = vmatpush2.msra.mxu0 0.0
        %620 = vmatprep.subr.mxu0 0.0
        %621 = vmatpush2.msra.mxu0 0.0
        %622 = vmatprep.subr.mxu0 0.0
        %623 = vmatpush2.msra.mxu0 0.0
        %624 = vmatprep.subr.mxu0 0.0
        %625 = vmatpush2.msra.mxu0 0.0
        %626 = vmatprep.subr.mxu0 0.0
        %627 = vmatpush2.msra.mxu0 0.0
        %628 = vmatprep.subr.mxu0 0.0
        %629 = vmatpush2.msra.mxu0 0.0
        %630 = vmatprep.subr.mxu0 0.0
        %631 = vmatpush2.msra.mxu0 0.0
        %632 = vmatprep.subr.mxu0 0.0
        %633 = vmatpush2.msra.mxu0 0.0
        %634 = vmatprep.subr.mxu0 0.0
        %635 = vmatpush2.msra.mxu0 0.0
        %636 = vmatprep.subr.mxu0 0.0
        %637 = vmatpush2.msra.mxu0 0.0
        %638 = vmatprep.subr.mxu0 0.0
        %639 = vmatpush2.msra.mxu0 0.0
        %640 = vmatprep.subr.mxu0 0.0
        %641 = vmatpush2.msra.mxu0 0.0
        %642 = vmatprep.subr.mxu0 0.0
        %643 = vmatpush2.msra.mxu0 0.0
        %644 = vmatprep.subr.mxu0 0.0
        %645 = vmatpush2.msra.mxu0 0.0
        %646 = vmatprep.subr.mxu0 0.0
        %647 = vmatpush2.msra.mxu0 0.0
        %648 = vmatprep.mubr.f32.mxu0 0.0
        %649 = vmatmul.mubr.f32.gmra.mxu0 %v578
        %v650 = vpop.f32.mrf.mxu0
        %v651 = vadd.f32 0.0, %v650
        %v652 = vpop.f32.mrf.mxu0
        %v653 = vadd.f32 0.0, %v652
        %654 = vdwg.mxu0
        %v655 = vmax.f32 %v651, %v653
        %656 = vmax.xlane.f32.xlu0 %v655
        %v657 = vpop.xlane.xlu0 %656
        %v658 = vmax.f32 %v573, %v657
        %659 = vrot.lane.b32.xlu0 %v355, 120
        %v660 = vpop.permute.xlu0 %659
        %v661 = vsel %vm277, %v660, 0
        %v664 = vsel %vm281, %v475, 0
        %v667 = vsel %vm281, %v477, 0
        %669 = vmatprep.subr.mxu0 0.0
        %670 = vmatpush1.msra.mxu0 0.0
        %671 = vmatprep.subr.mxu0 0.0
        %672 = vmatpush1.msra.mxu0 0.0
        %673 = vmatprep.subr.mxu0 0.0
        %674 = vmatpush1.msra.mxu0 0.0
        %675 = vmatprep.subr.mxu0 0.0
        %676 = vmatpush1.msra.mxu0 0.0
        %677 = vmatprep.subr.mxu0 0.0
        %678 = vmatpush1.msra.mxu0 0.0
        %679 = vmatprep.subr.mxu0 0.0
        %680 = vmatpush1.msra.mxu0 0.0
        %681 = vmatprep.subr.mxu0 0.0
        %682 = vmatpush1.msra.mxu0 0.0
        %683 = vmatprep.subr.mxu0 0.0
        %684 = vmatpush1.msra.mxu0 0.0
        %685 = vmatprep.subr.mxu0 0.0
        %686 = vmatpush1.msra.mxu0 0.0
        %687 = vmatprep.subr.mxu0 0.0
        %688 = vmatpush1.msra.mxu0 0.0
        %689 = vmatprep.subr.mxu0 0.0
        %690 = vmatpush1.msra.mxu0 0.0
        %691 = vmatprep.subr.mxu0 0.0
        %692 = vmatpush1.msra.mxu0 0.0
        %693 = vmatprep.subr.mxu0 0.0
        %694 = vmatpush1.msra.mxu0 0.0
        %695 = vmatprep.subr.mxu0 0.0
        %696 = vmatpush1.msra.mxu0 0.0
        %697 = vmatprep.subr.mxu0 0.0
        %698 = vmatpush1.msra.mxu0 0.0
        %699 = vmatprep.subr.mxu0 %v667
        %700 = vmatpush1.msra.mxu0 %v664
        %701 = vmatprep.subr.mxu0 0.0
        %702 = vmatpush2.msra.mxu0 0.0
        %703 = vmatprep.subr.mxu0 0.0
        %704 = vmatpush2.msra.mxu0 0.0
        %705 = vmatprep.subr.mxu0 0.0
        %706 = vmatpush2.msra.mxu0 0.0
        %707 = vmatprep.subr.mxu0 0.0
        %708 = vmatpush2.msra.mxu0 0.0
        %709 = vmatprep.subr.mxu0 0.0
        %710 = vmatpush2.msra.mxu0 0.0
        %711 = vmatprep.subr.mxu0 0.0
        %712 = vmatpush2.msra.mxu0 0.0
        %713 = vmatprep.subr.mxu0 0.0
        %714 = vmatpush2.msra.mxu0 0.0
        %715 = vmatprep.subr.mxu0 0.0
        %716 = vmatpush2.msra.mxu0 0.0
        %717 = vmatprep.subr.mxu0 0.0
        %718 = vmatpush2.msra.mxu0 0.0
        %719 = vmatprep.subr.mxu0 0.0
        %720 = vmatpush2.msra.mxu0 0.0
        %721 = vmatprep.subr.mxu0 0.0
        %722 = vmatpush2.msra.mxu0 0.0
        %723 = vmatprep.subr.mxu0 0.0
        %724 = vmatpush2.msra.mxu0 0.0
        %725 = vmatprep.subr.mxu0 0.0
        %726 = vmatpush2.msra.mxu0 0.0
        %727 = vmatprep.subr.mxu0 0.0
        %728 = vmatpush2.msra.mxu0 0.0
        %729 = vmatprep.subr.mxu0 0.0
        %730 = vmatpush2.msra.mxu0 0.0
        %731 = vmatprep.subr.mxu0 0.0
        %732 = vmatpush2.msra.mxu0 0.0
        %733 = vmatprep.mubr.f32.mxu0 0.0
        %734 = vmatmul.mubr.f32.gmra.mxu0 %v661
        %v735 = vpop.f32.mrf.mxu0
        %v736 = vadd.f32 0.0, %v735
        %v737 = vpop.f32.mrf.mxu0
        %v738 = vadd.f32 0.0, %v737
        %739 = vdwg.mxu0
        %v740 = vmax.f32 %v736, %v738
        %741 = vmax.xlane.f32.xlu0 %v740
        %v742 = vpop.xlane.xlu0 %741
        %v743 = vmax.f32 %v658, %v742
        %744 = vrot.lane.b32.xlu0 %v355, 116
        %v745 = vpop.permute.xlu0 %744
        %v746 = vrot.slane %v475, 4
        %v747 = vrot.slane %v477, 4
        %v748 = vsel %vm277, %v745, 0
        %v750 = vsel %vm281, %v746, 0
        %v752 = vsel %vm281, %v747, 0
        %754 = vmatprep.subr.mxu0 0.0
        %755 = vmatpush1.msra.mxu0 0.0
        %756 = vmatprep.subr.mxu0 0.0
        %757 = vmatpush1.msra.mxu0 0.0
        %758 = vmatprep.subr.mxu0 0.0
        %759 = vmatpush1.msra.mxu0 0.0
        %760 = vmatprep.subr.mxu0 0.0
        %761 = vmatpush1.msra.mxu0 0.0
        %762 = vmatprep.subr.mxu0 0.0
        %763 = vmatpush1.msra.mxu0 0.0
        %764 = vmatprep.subr.mxu0 0.0
        %765 = vmatpush1.msra.mxu0 0.0
        %766 = vmatprep.subr.mxu0 0.0
        %767 = vmatpush1.msra.mxu0 0.0
        %768 = vmatprep.subr.mxu0 0.0
        %769 = vmatpush1.msra.mxu0 0.0
        %770 = vmatprep.subr.mxu0 0.0
        %771 = vmatpush1.msra.mxu0 0.0
        %772 = vmatprep.subr.mxu0 0.0
        %773 = vmatpush1.msra.mxu0 0.0
        %774 = vmatprep.subr.mxu0 0.0
        %775 = vmatpush1.msra.mxu0 0.0
        %776 = vmatprep.subr.mxu0 0.0
        %777 = vmatpush1.msra.mxu0 0.0
        %778 = vmatprep.subr.mxu0 0.0
        %779 = vmatpush1.msra.mxu0 0.0
        %780 = vmatprep.subr.mxu0 0.0
        %781 = vmatpush1.msra.mxu0 0.0
        %782 = vmatprep.subr.mxu0 0.0
        %783 = vmatpush1.msra.mxu0 0.0
        %784 = vmatprep.subr.mxu0 %v752
        %785 = vmatpush1.msra.mxu0 %v750
        %786 = vmatprep.subr.mxu0 0.0
        %787 = vmatpush2.msra.mxu0 0.0
        %788 = vmatprep.subr.mxu0 0.0
        %789 = vmatpush2.msra.mxu0 0.0
        %790 = vmatprep.subr.mxu0 0.0
        %791 = vmatpush2.msra.mxu0 0.0
        %792 = vmatprep.subr.mxu0 0.0
        %793 = vmatpush2.msra.mxu0 0.0
        %794 = vmatprep.subr.mxu0 0.0
        %795 = vmatpush2.msra.mxu0 0.0
        %796 = vmatprep.subr.mxu0 0.0
        %797 = vmatpush2.msra.mxu0 0.0
        %798 = vmatprep.subr.mxu0 0.0
        %799 = vmatpush2.msra.mxu0 0.0
        %800 = vmatprep.subr.mxu0 0.0
        %801 = vmatpush2.msra.mxu0 0.0
        %802 = vmatprep.subr.mxu0 0.0
        %803 = vmatpush2.msra.mxu0 0.0
        %804 = vmatprep.subr.mxu0 0.0
        %805 = vmatpush2.msra.mxu0 0.0
        %806 = vmatprep.subr.mxu0 0.0
        %807 = vmatpush2.msra.mxu0 0.0
        %808 = vmatprep.subr.mxu0 0.0
        %809 = vmatpush2.msra.mxu0 0.0
        %810 = vmatprep.subr.mxu0 0.0
        %811 = vmatpush2.msra.mxu0 0.0
        %812 = vmatprep.subr.mxu0 0.0
        %813 = vmatpush2.msra.mxu0 0.0
        %814 = vmatprep.subr.mxu0 0.0
        %815 = vmatpush2.msra.mxu0 0.0
        %816 = vmatprep.subr.mxu0 0.0
        %817 = vmatpush2.msra.mxu0 0.0
        %818 = vmatprep.mubr.f32.mxu0 0.0
        %819 = vmatmul.mubr.f32.gmra.mxu0 %v748
        %v820 = vpop.f32.mrf.mxu0
        %v821 = vadd.f32 0.0, %v820
        %v822 = vpop.f32.mrf.mxu0
        %v823 = vadd.f32 0.0, %v822
        %824 = vdwg.mxu0
        %v825 = vmax.f32 %v821, %v823
        %826 = vmax.xlane.f32.xlu0 %v825
        %v827 = vpop.xlane.xlu0 %826
        %v828 = vmax.f32 %v743, %v827
        %829 = vrot.lane.b32.xlu0 %v355, 112
        %v830 = vpop.permute.xlu0 %829
        %v831 = vsel %vm277, %v830, 0
        %v834 = vsel %vm281, %v481, 0
        %v837 = vsel %vm281, %v483, 0
        %839 = vmatprep.subr.mxu0 0.0
        %840 = vmatpush1.msra.mxu0 0.0
        %841 = vmatprep.subr.mxu0 0.0
        %842 = vmatpush1.msra.mxu0 0.0
        %843 = vmatprep.subr.mxu0 0.0
        %844 = vmatpush1.msra.mxu0 0.0
        %845 = vmatprep.subr.mxu0 0.0
        %846 = vmatpush1.msra.mxu0 0.0
        %847 = vmatprep.subr.mxu0 0.0
        %848 = vmatpush1.msra.mxu0 0.0
        %849 = vmatprep.subr.mxu0 0.0
        %850 = vmatpush1.msra.mxu0 0.0
        %851 = vmatprep.subr.mxu0 0.0
        %852 = vmatpush1.msra.mxu0 0.0
        %853 = vmatprep.subr.mxu0 0.0
        %854 = vmatpush1.msra.mxu0 0.0
        %855 = vmatprep.subr.mxu0 0.0
        %856 = vmatpush1.msra.mxu0 0.0
        %857 = vmatprep.subr.mxu0 0.0
        %858 = vmatpush1.msra.mxu0 0.0
        %859 = vmatprep.subr.mxu0 0.0
        %860 = vmatpush1.msra.mxu0 0.0
        %861 = vmatprep.subr.mxu0 0.0
        %862 = vmatpush1.msra.mxu0 0.0
        %863 = vmatprep.subr.mxu0 0.0
        %864 = vmatpush1.msra.mxu0 0.0
        %865 = vmatprep.subr.mxu0 0.0
        %866 = vmatpush1.msra.mxu0 0.0
        %867 = vmatprep.subr.mxu0 0.0
        %868 = vmatpush1.msra.mxu0 0.0
        %869 = vmatprep.subr.mxu0 %v837
        %870 = vmatpush1.msra.mxu0 %v834
        %871 = vmatprep.subr.mxu0 0.0
        %872 = vmatpush2.msra.mxu0 0.0
        %873 = vmatprep.subr.mxu0 0.0
        %874 = vmatpush2.msra.mxu0 0.0
        %875 = vmatprep.subr.mxu0 0.0
        %876 = vmatpush2.msra.mxu0 0.0
        %877 = vmatprep.subr.mxu0 0.0
        %878 = vmatpush2.msra.mxu0 0.0
        %879 = vmatprep.subr.mxu0 0.0
        %880 = vmatpush2.msra.mxu0 0.0
        %881 = vmatprep.subr.mxu0 0.0
        %882 = vmatpush2.msra.mxu0 0.0
        %883 = vmatprep.subr.mxu0 0.0
        %884 = vmatpush2.msra.mxu0 0.0
        %885 = vmatprep.subr.mxu0 0.0
        %886 = vmatpush2.msra.mxu0 0.0
        %887 = vmatprep.subr.mxu0 0.0
        %888 = vmatpush2.msra.mxu0 0.0
        %889 = vmatprep.subr.mxu0 0.0
        %890 = vmatpush2.msra.mxu0 0.0
        %891 = vmatprep.subr.mxu0 0.0
        %892 = vmatpush2.msra.mxu0 0.0
        %893 = vmatprep.subr.mxu0 0.0
        %894 = vmatpush2.msra.mxu0 0.0
        %895 = vmatprep.subr.mxu0 0.0
        %896 = vmatpush2.msra.mxu0 0.0
        %897 = vmatprep.subr.mxu0 0.0
        %898 = vmatpush2.msra.mxu0 0.0
        %899 = vmatprep.subr.mxu0 0.0
        %900 = vmatpush2.msra.mxu0 0.0
        %901 = vmatprep.subr.mxu0 0.0
        %902 = vmatpush2.msra.mxu0 0.0
        %903 = vmatprep.mubr.f32.mxu0 0.0
        %904 = vmatmul.mubr.f32.gmra.mxu0 %v831
        %v905 = vpop.f32.mrf.mxu0
        %v906 = vadd.f32 0.0, %v905
        %v907 = vpop.f32.mrf.mxu0
        %v908 = vadd.f32 0.0, %v907
        %909 = vdwg.mxu0
        %v910 = vmax.f32 %v906, %v908
        %911 = vmax.xlane.f32.xlu0 %v910
        %v912 = vpop.xlane.xlu0 %911
        %v913 = vmax.f32 %v828, %v912
        %914 = vrot.lane.b32.xlu0 %v355, 108
        %v915 = vpop.permute.xlu0 %914
        %v916 = vrot.slane %v481, 4
        %v917 = vrot.slane %v483, 4
        %v918 = vsel %vm277, %v915, 0
        %v920 = vsel %vm281, %v916, 0
        %v922 = vsel %vm281, %v917, 0
        %924 = vmatprep.subr.mxu0 0.0
        %925 = vmatpush1.msra.mxu0 0.0
        %926 = vmatprep.subr.mxu0 0.0
        %927 = vmatpush1.msra.mxu0 0.0
        %928 = vmatprep.subr.mxu0 0.0
        %929 = vmatpush1.msra.mxu0 0.0
        %930 = vmatprep.subr.mxu0 0.0
        %931 = vmatpush1.msra.mxu0 0.0
        %932 = vmatprep.subr.mxu0 0.0
        %933 = vmatpush1.msra.mxu0 0.0
        %934 = vmatprep.subr.mxu0 0.0
        %935 = vmatpush1.msra.mxu0 0.0
        %936 = vmatprep.subr.mxu0 0.0
        %937 = vmatpush1.msra.mxu0 0.0
        %938 = vmatprep.subr.mxu0 0.0
        %939 = vmatpush1.msra.mxu0 0.0
        %940 = vmatprep.subr.mxu0 0.0
        %941 = vmatpush1.msra.mxu0 0.0
        %942 = vmatprep.subr.mxu0 0.0
        %943 = vmatpush1.msra.mxu0 0.0
        %944 = vmatprep.subr.mxu0 0.0
        %945 = vmatpush1.msra.mxu0 0.0
        %946 = vmatprep.subr.mxu0 0.0
        %947 = vmatpush1.msra.mxu0 0.0
        %948 = vmatprep.subr.mxu0 0.0
        %949 = vmatpush1.msra.mxu0 0.0
        %950 = vmatprep.subr.mxu0 0.0
        %951 = vmatpush1.msra.mxu0 0.0
        %952 = vmatprep.subr.mxu0 0.0
        %953 = vmatpush1.msra.mxu0 0.0
        %954 = vmatprep.subr.mxu0 %v922
        %955 = vmatpush1.msra.mxu0 %v920
        %956 = vmatprep.subr.mxu0 0.0
        %957 = vmatpush2.msra.mxu0 0.0
        %958 = vmatprep.subr.mxu0 0.0
        %959 = vmatpush2.msra.mxu0 0.0
        %960 = vmatprep.subr.mxu0 0.0
        %961 = vmatpush2.msra.mxu0 0.0
        %962 = vmatprep.subr.mxu0 0.0
        %963 = vmatpush2.msra.mxu0 0.0
        %964 = vmatprep.subr.mxu0 0.0
        %965 = vmatpush2.msra.mxu0 0.0
        %966 = vmatprep.subr.mxu0 0.0
        %967 = vmatpush2.msra.mxu0 0.0
        %968 = vmatprep.subr.mxu0 0.0
        %969 = vmatpush2.msra.mxu0 0.0
        %970 = vmatprep.subr.mxu0 0.0
        %971 = vmatpush2.msra.mxu0 0.0
        %972 = vmatprep.subr.mxu0 0.0
        %973 = vmatpush2.msra.mxu0 0.0
        %974 = vmatprep.subr.mxu0 0.0
        %975 = vmatpush2.msra.mxu0 0.0
        %976 = vmatprep.subr.mxu0 0.0
        %977 = vmatpush2.msra.mxu0 0.0
        %978 = vmatprep.subr.mxu0 0.0
        %979 = vmatpush2.msra.mxu0 0.0
        %980 = vmatprep.subr.mxu0 0.0
        %981 = vmatpush2.msra.mxu0 0.0
        %982 = vmatprep.subr.mxu0 0.0
        %983 = vmatpush2.msra.mxu0 0.0
        %984 = vmatprep.subr.mxu0 0.0
        %985 = vmatpush2.msra.mxu0 0.0
        %986 = vmatprep.subr.mxu0 0.0
        %987 = vmatpush2.msra.mxu0 0.0
        %988 = vmatprep.mubr.f32.mxu0 0.0
        %989 = vmatmul.mubr.f32.gmra.mxu0 %v918
        %v990 = vpop.f32.mrf.mxu0
        %v991 = vadd.f32 0.0, %v990
        %v992 = vpop.f32.mrf.mxu0
        %v993 = vadd.f32 0.0, %v992
        %994 = vdwg.mxu0
        %v995 = vmax.f32 %v991, %v993
        %996 = vmax.xlane.f32.xlu0 %v995
        %v997 = vpop.xlane.xlu0 %996
        %v998 = vmax.f32 %v913, %v997
        %999 = vrot.lane.b32.xlu0 %v355, 104
        %v1000 = vpop.permute.xlu0 %999
        %v1001 = vsel %vm277, %v1000, 0
        %v1004 = vsel %vm281, %v487, 0
        %v1007 = vsel %vm281, %v489, 0
        %1009 = vmatprep.subr.mxu0 0.0
        %1010 = vmatpush1.msra.mxu0 0.0
        %1011 = vmatprep.subr.mxu0 0.0
        %1012 = vmatpush1.msra.mxu0 0.0
        %1013 = vmatprep.subr.mxu0 0.0
        %1014 = vmatpush1.msra.mxu0 0.0
        %1015 = vmatprep.subr.mxu0 0.0
        %1016 = vmatpush1.msra.mxu0 0.0
        %1017 = vmatprep.subr.mxu0 0.0
        %1018 = vmatpush1.msra.mxu0 0.0
        %1019 = vmatprep.subr.mxu0 0.0
        %1020 = vmatpush1.msra.mxu0 0.0
        %1021 = vmatprep.subr.mxu0 0.0
        %1022 = vmatpush1.msra.mxu0 0.0
        %1023 = vmatprep.subr.mxu0 0.0
        %1024 = vmatpush1.msra.mxu0 0.0
        %1025 = vmatprep.subr.mxu0 0.0
        %1026 = vmatpush1.msra.mxu0 0.0
        %1027 = vmatprep.subr.mxu0 0.0
        %1028 = vmatpush1.msra.mxu0 0.0
        %1029 = vmatprep.subr.mxu0 0.0
        %1030 = vmatpush1.msra.mxu0 0.0
        %1031 = vmatprep.subr.mxu0 0.0
        %1032 = vmatpush1.msra.mxu0 0.0
        %1033 = vmatprep.subr.mxu0 0.0
        %1034 = vmatpush1.msra.mxu0 0.0
        %1035 = vmatprep.subr.mxu0 0.0
        %1036 = vmatpush1.msra.mxu0 0.0
        %1037 = vmatprep.subr.mxu0 0.0
        %1038 = vmatpush1.msra.mxu0 0.0
        %1039 = vmatprep.subr.mxu0 %v1007
        %1040 = vmatpush1.msra.mxu0 %v1004
        %1041 = vmatprep.subr.mxu0 0.0
        %1042 = vmatpush2.msra.mxu0 0.0
        %1043 = vmatprep.subr.mxu0 0.0
        %1044 = vmatpush2.msra.mxu0 0.0
        %1045 = vmatprep.subr.mxu0 0.0
        %1046 = vmatpush2.msra.mxu0 0.0
        %1047 = vmatprep.subr.mxu0 0.0
        %1048 = vmatpush2.msra.mxu0 0.0
        %1049 = vmatprep.subr.mxu0 0.0
        %1050 = vmatpush2.msra.mxu0 0.0
        %1051 = vmatprep.subr.mxu0 0.0
        %1052 = vmatpush2.msra.mxu0 0.0
        %1053 = vmatprep.subr.mxu0 0.0
        %1054 = vmatpush2.msra.mxu0 0.0
        %1055 = vmatprep.subr.mxu0 0.0
        %1056 = vmatpush2.msra.mxu0 0.0
        %1057 = vmatprep.subr.mxu0 0.0
        %1058 = vmatpush2.msra.mxu0 0.0
        %1059 = vmatprep.subr.mxu0 0.0
        %1060 = vmatpush2.msra.mxu0 0.0
        %1061 = vmatprep.subr.mxu0 0.0
        %1062 = vmatpush2.msra.mxu0 0.0
        %1063 = vmatprep.subr.mxu0 0.0
        %1064 = vmatpush2.msra.mxu0 0.0
        %1065 = vmatprep.subr.mxu0 0.0
        %1066 = vmatpush2.msra.mxu0 0.0
        %1067 = vmatprep.subr.mxu0 0.0
        %1068 = vmatpush2.msra.mxu0 0.0
        %1069 = vmatprep.subr.mxu0 0.0
        %1070 = vmatpush2.msra.mxu0 0.0
        %1071 = vmatprep.subr.mxu0 0.0
        %1072 = vmatpush2.msra.mxu0 0.0
        %1073 = vmatprep.mubr.f32.mxu0 0.0
        %1074 = vmatmul.mubr.f32.gmra.mxu0 %v1001
        %v1075 = vpop.f32.mrf.mxu0
        %v1076 = vadd.f32 0.0, %v1075
        %v1077 = vpop.f32.mrf.mxu0
        %v1078 = vadd.f32 0.0, %v1077
        %1079 = vdwg.mxu0
        %v1080 = vmax.f32 %v1076, %v1078
        %1081 = vmax.xlane.f32.xlu0 %v1080
        %v1082 = vpop.xlane.xlu0 %1081
        %v1083 = vmax.f32 %v998, %v1082
        %1084 = vrot.lane.b32.xlu0 %v355, 100
        %v1085 = vpop.permute.xlu0 %1084
        %v1086 = vrot.slane %v487, 4
        %v1087 = vrot.slane %v489, 4
        %v1088 = vsel %vm277, %v1085, 0
        %v1090 = vsel %vm281, %v1086, 0
        %v1092 = vsel %vm281, %v1087, 0
        %1094 = vmatprep.subr.mxu0 0.0
        %1095 = vmatpush1.msra.mxu0 0.0
        %1096 = vmatprep.subr.mxu0 0.0
        %1097 = vmatpush1.msra.mxu0 0.0
        %1098 = vmatprep.subr.mxu0 0.0
        %1099 = vmatpush1.msra.mxu0 0.0
        %1100 = vmatprep.subr.mxu0 0.0
        %1101 = vmatpush1.msra.mxu0 0.0
        %1102 = vmatprep.subr.mxu0 0.0
        %1103 = vmatpush1.msra.mxu0 0.0
        %1104 = vmatprep.subr.mxu0 0.0
        %1105 = vmatpush1.msra.mxu0 0.0
        %1106 = vmatprep.subr.mxu0 0.0
        %1107 = vmatpush1.msra.mxu0 0.0
        %1108 = vmatprep.subr.mxu0 0.0
        %1109 = vmatpush1.msra.mxu0 0.0
        %1110 = vmatprep.subr.mxu0 0.0
        %1111 = vmatpush1.msra.mxu0 0.0
        %1112 = vmatprep.subr.mxu0 0.0
        %1113 = vmatpush1.msra.mxu0 0.0
        %1114 = vmatprep.subr.mxu0 0.0
        %1115 = vmatpush1.msra.mxu0 0.0
        %1116 = vmatprep.subr.mxu0 0.0
        %1117 = vmatpush1.msra.mxu0 0.0
        %1118 = vmatprep.subr.mxu0 0.0
        %1119 = vmatpush1.msra.mxu0 0.0
        %1120 = vmatprep.subr.mxu0 0.0
        %1121 = vmatpush1.msra.mxu0 0.0
        %1122 = vmatprep.subr.mxu0 0.0
        %1123 = vmatpush1.msra.mxu0 0.0
        %1124 = vmatprep.subr.mxu0 %v1092
        %1125 = vmatpush1.msra.mxu0 %v1090
        %1126 = vmatprep.subr.mxu0 0.0
        %1127 = vmatpush2.msra.mxu0 0.0
        %1128 = vmatprep.subr.mxu0 0.0
        %1129 = vmatpush2.msra.mxu0 0.0
        %1130 = vmatprep.subr.mxu0 0.0
        %1131 = vmatpush2.msra.mxu0 0.0
        %1132 = vmatprep.subr.mxu0 0.0
        %1133 = vmatpush2.msra.mxu0 0.0
        %1134 = vmatprep.subr.mxu0 0.0
        %1135 = vmatpush2.msra.mxu0 0.0
        %1136 = vmatprep.subr.mxu0 0.0
        %1137 = vmatpush2.msra.mxu0 0.0
        %1138 = vmatprep.subr.mxu0 0.0
        %1139 = vmatpush2.msra.mxu0 0.0
        %1140 = vmatprep.subr.mxu0 0.0
        %1141 = vmatpush2.msra.mxu0 0.0
        %1142 = vmatprep.subr.mxu0 0.0
        %1143 = vmatpush2.msra.mxu0 0.0
        %1144 = vmatprep.subr.mxu0 0.0
        %1145 = vmatpush2.msra.mxu0 0.0
        %1146 = vmatprep.subr.mxu0 0.0
        %1147 = vmatpush2.msra.mxu0 0.0
        %1148 = vmatprep.subr.mxu0 0.0
        %1149 = vmatpush2.msra.mxu0 0.0
        %1150 = vmatprep.subr.mxu0 0.0
        %1151 = vmatpush2.msra.mxu0 0.0
        %1152 = vmatprep.subr.mxu0 0.0
        %1153 = vmatpush2.msra.mxu0 0.0
        %1154 = vmatprep.subr.mxu0 0.0
        %1155 = vmatpush2.msra.mxu0 0.0
        %1156 = vmatprep.subr.mxu0 0.0
        %1157 = vmatpush2.msra.mxu0 0.0
        %1158 = vmatprep.mubr.f32.mxu0 0.0
        %1159 = vmatmul.mubr.f32.gmra.mxu0 %v1088
        %v1160 = vpop.f32.mrf.mxu0
        %v1161 = vadd.f32 0.0, %v1160
        %v1162 = vpop.f32.mrf.mxu0
        %v1163 = vadd.f32 0.0, %v1162
        %1164 = vdwg.mxu0
        %v1165 = vmax.f32 %v1161, %v1163
        %1166 = vmax.xlane.f32.xlu0 %v1165
        %v1167 = vpop.xlane.xlu0 %1166
        %v1168 = vmax.f32 %v1083, %v1167
        %v1169 = vsub.f32 %v567, %v1168
        %v1170 = vsub.f32 %v569, %v1168
        %v1171 = vmul.f32 %v1169, 1.442695
        %v1172 = vpow.pop %v1171
        %v1173 = vmul.f32 %v1170, 1.442695
        %v1174 = vpow.pop %v1173
        %v1175 = vadd.f32 %v1172, %v1174
        %1176 = vadd.xlane.f32.xlu0 %v1175
        %v1177 = vpop.xlane.xlu0 %1176
        %v1178 = vsub.f32 %v651, %v1168
        %v1179 = vsub.f32 %v653, %v1168
        %v1180 = vmul.f32 %v1178, 1.442695
        %v1181 = vpow.pop %v1180
        %v1182 = vmul.f32 %v1179, 1.442695
        %v1183 = vpow.pop %v1182
        %v1184 = vadd.f32 %v1181, %v1183
        %1185 = vadd.xlane.f32.xlu0 %v1184
        %v1186 = vpop.xlane.xlu0 %1185
        %v1187 = vadd.f32 %v1177, %v1186
        %v1188 = vsub.f32 %v736, %v1168
        %v1189 = vsub.f32 %v738, %v1168
        %v1190 = vmul.f32 %v1188, 1.442695
        %v1191 = vpow.pop %v1190
        %v1192 = vmul.f32 %v1189, 1.442695
        %v1193 = vpow.pop %v1192
        %v1194 = vadd.f32 %v1191, %v1193
        %1195 = vadd.xlane.f32.xlu0 %v1194
        %v1196 = vpop.xlane.xlu0 %1195
        %v1197 = vadd.f32 %v1187, %v1196
        %v1198 = vsub.f32 %v821, %v1168
        %v1199 = vsub.f32 %v823, %v1168
        %v1200 = vmul.f32 %v1198, 1.442695
        %v1201 = vpow.pop %v1200
        %v1202 = vmul.f32 %v1199, 1.442695
        %v1203 = vpow.pop %v1202
        %v1204 = vadd.f32 %v1201, %v1203
        %1205 = vadd.xlane.f32.xlu0 %v1204
        %v1206 = vpop.xlane.xlu0 %1205
        %v1207 = vadd.f32 %v1197, %v1206
        %v1208 = vsub.f32 %v906, %v1168
        %v1209 = vsub.f32 %v908, %v1168
        %v1210 = vmul.f32 %v1208, 1.442695
        %v1211 = vpow.pop %v1210
        %v1212 = vmul.f32 %v1209, 1.442695
        %v1213 = vpow.pop %v1212
        %v1214 = vadd.f32 %v1211, %v1213
        %1215 = vadd.xlane.f32.xlu0 %v1214
        %v1216 = vpop.xlane.xlu0 %1215
        %v1217 = vadd.f32 %v1207, %v1216
        %v1218 = vsub.f32 %v991, %v1168
        %v1219 = vsub.f32 %v993, %v1168
        %v1220 = vmul.f32 %v1218, 1.442695
        %v1221 = vpow.pop %v1220
        %v1222 = vmul.f32 %v1219, 1.442695
        %v1223 = vpow.pop %v1222
        %v1224 = vadd.f32 %v1221, %v1223
        %1225 = vadd.xlane.f32.xlu0 %v1224
        %v1226 = vpop.xlane.xlu0 %1225
        %v1227 = vadd.f32 %v1217, %v1226
        %v1228 = vsub.f32 %v1076, %v1168
        %v1229 = vsub.f32 %v1078, %v1168
        %v1230 = vmul.f32 %v1228, 1.442695
        %v1231 = vpow.pop %v1230
        %v1232 = vmul.f32 %v1229, 1.442695
        %v1233 = vpow.pop %v1232
        %v1234 = vadd.f32 %v1231, %v1233
        %1235 = vadd.xlane.f32.xlu0 %v1234
        %v1236 = vpop.xlane.xlu0 %1235
        %v1237 = vadd.f32 %v1227, %v1236
        %v1238 = vsub.f32 %v1161, %v1168
        %v1239 = vsub.f32 %v1163, %v1168
        %v1240 = vmul.f32 %v1238, 1.442695
        %v1241 = vpow.pop %v1240
        %v1242 = vmul.f32 %v1239, 1.442695
        %v1243 = vpow.pop %v1242
        %v1244 = vadd.f32 %v1241, %v1243
        %1245 = vadd.xlane.f32.xlu0 %v1244
        %v1246 = vpop.xlane.xlu0 %1245
        %v1247 = vadd.f32 %v1237, %v1246
        %v1248 = vrcp.pop %v1247
        %v1249 = vmul.f32 %v1172, %v1248
        %v1250 = vmul.f32 %v1174, %v1248
        %1251 = vst [vmem:[%s257] sm:$0xff] %v1249
        %1252 = vst [vmem:[%s257 + $0x8] sm:$0xff] %v1250
        %v1253 = vmul.f32 %v1181, %v1248
        %v1254 = vmul.f32 %v1183, %v1248
        %1255 = vst [vmem:[%s257 + $0x10] sm:$0xff] %v1253
        %1256 = vst [vmem:[%s257 + $0x18] sm:$0xff] %v1254
        %v1257 = vmul.f32 %v1191, %v1248
        %v1258 = vmul.f32 %v1193, %v1248
        %1259 = vst [vmem:[%s257 + $0x20] sm:$0xff] %v1257
        %1260 = vst [vmem:[%s257 + $0x28] sm:$0xff] %v1258
        %v1261 = vmul.f32 %v1201, %v1248
        %v1262 = vmul.f32 %v1203, %v1248
        %1263 = vst [vmem:[%s257 + $0x30] sm:$0xff] %v1261
        %1264 = vst [vmem:[%s257 + $0x38] sm:$0xff] %v1262
        %v1265 = vmul.f32 %v1211, %v1248
        %v1266 = vmul.f32 %v1213, %v1248
        %1267 = vst [vmem:[%s257 + $0x40] sm:$0xff] %v1265
        %1268 = vst [vmem:[%s257 + $0x48] sm:$0xff] %v1266
        %v1269 = vmul.f32 %v1221, %v1248
        %v1270 = vmul.f32 %v1223, %v1248
        %1271 = vst [vmem:[%s257 + $0x50] sm:$0xff] %v1269
        %1272 = vst [vmem:[%s257 + $0x58] sm:$0xff] %v1270
        %v1273 = vmul.f32 %v1231, %v1248
        %v1274 = vmul.f32 %v1233, %v1248
        %1275 = vst [vmem:[%s257 + $0x60] sm:$0xff] %v1273
        %1276 = vst [vmem:[%s257 + $0x68] sm:$0xff] %v1274
        %v1277 = vmul.f32 %v1241, %v1248
        %v1278 = vmul.f32 %v1243, %v1248
        %1279 = vst [vmem:[%s257 + $0x70] sm:$0xff] %v1277
        %1280 = vst [vmem:[%s257 + $0x78] sm:$0xff] %v1278
        %s1281 = sand.u32 %s164, 1
        %s1282 = scalar_lea.sflag [#allocation3], %s1281
        %s1283 = sand.u32 %s164, 1
        %s1284 = smul.addr %s1283, 128
        %s1285 = scalar_lea.vmem [#allocation2], %s1284
        // Predicated region
        $region45: #{tpu_custom_call.1} parent=43 // pred_check
          %p1286 = pneg %p174
        $region46: #{tpu_custom_call.1} parent=43 // pred_check_branch
          %1288 = sbr.rel (%p1286) target = $region48
        $region47: #{tpu_custom_call.1} parent=43 // pred_region
          %s1290 = ssub.s32 2048, 2048
          %1291 = vsyncadd %s1282, %s1290
          %s1292 = smul.addr %s20, 16
          %s1293 = smul.addr %s1292, 128
          %s1294 = scalar_lea.hbm %s6, %s1293
          %s1296 = sshll.u32 %s1285, 4
          %s1297 = int_to_ptr.vmem [resolvable:$true] %s1296
          %1299 = dma.vmem_to_hbm [thread:$0]  %s1297, 2048, %s1294, %s1282
        $region48: #{tpu_custom_call.1} parent=43 // pred_fallthru
          _
      $region44: #{tpu_custom_call.1} parent=5 // pred_fallthru
        _
      %p1300 = scmp.le.s32.totalorder 2, %s15
      // Predicated region
      $region49: #{tpu_custom_call.1} parent=5 // pred_check
        %p1301 = pneg %p1300
      $region50: #{tpu_custom_call.1} parent=5 // pred_check_branch
        %1303 = sbr.rel (%p1301) target = $region52
      $region51: #{tpu_custom_call.1} parent=5 // pred_region
        %s1304 = ssub.s32 %s15, 2
        // Predicated region
        $region53: #{tpu_custom_call.1} parent=51 // pred_check
          %p1305 = pneg %p180
        $region54: #{tpu_custom_call.1} parent=51 // pred_check_branch
          %1307 = sbr.rel (%p1305) target = $region56
        $region55: #{tpu_custom_call.1} parent=51 // pred_region
          %s1308 = sand.u32 %s165, 1
          %s1309 = scalar_lea.sflag [#allocation3], %s1308
          %s1310 = sand.u32 %s165, 1
          %s1311 = smul.addr %s1310, 128
          %s1312 = scalar_lea.vmem [#allocation2], %s1311
          %1313 = dma.done %s1309, 2048
        $region56: #{tpu_custom_call.1} parent=51 // pred_fallthru
          _
      $region52: #{tpu_custom_call.1} parent=5 // pred_fallthru
        _
    $region6: #{tpu_custom_call.1} parent=1 // loop_footer
      %s19 = sadd.s32 1, %s15
    $region7: #{tpu_custom_call.1} parent=1 // loop_footer_branch
      %14 = sbr.rel target = $region3
    $region8: #{tpu_custom_call.1} parent=1 // loop_exit
      _
    %1314 = vsyncpa [#allocation3], 1
    %s1315 = scalar_lea.sflag [#allocation3], 1
    %1316 = vsyncpa %s1315, 1

</llo_original>
